<compile_context>
chip_gen: v7x
topology: tpu7x:2x2x1
jax: 0.10.0
libtpu: 0.0.40
codegen_flags: <defaults>
</compile_context>

<pallas_src>
import functools

import jax
import jax.numpy as jnp
from jax.experimental import pallas as pl
from jax.experimental.pallas import tpu as pltpu


# --------------------------------------------------------------------------
# Kernel
# --------------------------------------------------------------------------
def _propagation_kernel(
    # 8 multireflected-layer coefficient refs, each (TB, L*C), native dtype
    t_direct_ref, t_diffuse_ref, t_multi_direct_ref, t_multi_diffuse_ref,
    r_surf_dir_ref, r_surf_dif_ref, a_dir_ref, a_dif_ref,
    # per-column refs, each (TB, C)
    up_refl_toa_ref, flux_direct_ref, flux_diffuse_ref,
    # outputs: (TB, L+1), (TB, L+1), (TB, L+1), (TB, L)
    fdd_ref, fdf_ref, fud_ref, fab_ref,
    *, n_layers, n_channel,
):
    C = n_channel
    f32 = jnp.float32

    # Upcast once on load; accumulate fd / ff in f32 regardless of input dtype.
    fd = flux_direct_ref[...].astype(f32)   # (TB, C)
    ff = flux_diffuse_ref[...].astype(f32)  # (TB, C)

    def csum(x):  # channel sum -> (TB, 1)
        return jnp.sum(x, axis=-1, keepdims=True)

    # Column 0 of the flux profiles (matches torch.stack(dim=1)+sum(dim=2)).
    fdd_ref[:, 0:1] = csum(fd)
    fdf_ref[:, 0:1] = csum(ff)
    fud_ref[:, 0:1] = csum(fd * up_refl_toa_ref[...].astype(f32))

    # Static unroll over layers (L is known at trace time and small in the
    # demo).  Layer i of every coefficient is the static lane range
    # [i*C, (i+1)*C) of the lane-dense (TB, L*C) block.
    # TODO(synk): for realistic layer counts (L ~ 50-60) switch to a
    # lax.fori_loop(unroll=2..4) with pl.ds lane offsets to bound code size.
    for i in range(n_layers):
        sl = slice(i * C, (i + 1) * C)
        a_d   = a_dir_ref[:, sl].astype(f32)
        a_f   = a_dif_ref[:, sl].astype(f32)
        r_sd  = r_surf_dir_ref[:, sl].astype(f32)
        r_sf  = r_surf_dif_ref[:, sl].astype(f32)
        t_dir = t_direct_ref[:, sl].astype(f32)
        t_dif = t_diffuse_ref[:, sl].astype(f32)
        t_md  = t_multi_direct_ref[:, sl].astype(f32)
        t_mf  = t_multi_diffuse_ref[:, sl].astype(f32)

        # All four per-layer quantities use the PRE-update fd / ff, matching
        # the PyTorch reference ordering exactly.
        fab_ref[:, i:i + 1]     = csum(fd * a_d + ff * a_f)
        fud_ref[:, i + 1:i + 2] = csum(fd * r_sd + ff * r_sf)

        fd_next = fd * t_dir
        # TODO(synk): if the producing kernel can pre-fuse
        # (t_diffuse + t_multi_diffuse) we stream 7 tensors instead of 8
        # (~12% fewer HBM bytes on this bandwidth-bound kernel).
        ff_next = fd * t_md + ff * (t_dif + t_mf)
        fdd_ref[:, i + 1:i + 2] = csum(fd_next)
        fdf_ref[:, i + 1:i + 2] = csum(ff_next)

        fd, ff = fd_next, ff_next
    # TODO(synk): once the kernel sits at HBM roofline, replace the 4*L
    # single-column (masked) VMEM stores with a lane-dense store of each
    # output block (second-order per the perf review; the HBM-facing store is
    # already one dense block DMA per grid step).


# --------------------------------------------------------------------------
# Tiling helpers (padding-aware VMEM footprint + generation-aware budget)
# --------------------------------------------------------------------------
def _round_up(x, m):
    return -(-x // m) * m


def _padded_block_bytes(shape, itemsize):
    """VMEM bytes of one block including Mosaic tiling padding: last dim
    rounds up to 128 lanes, second-to-last to the sublane tile (8 for 4-byte,
    16 for 2-byte, 32 for 1-byte dtypes)."""
    sub_tile = 8 * (4 // itemsize) if itemsize in (1, 2, 4) else 8
    lanes = _round_up(shape[-1], 128)
    subs = _round_up(shape[-2] if len(shape) >= 2 else 1, sub_tile)
    lead = 1
    for d in shape[:-2]:
        lead *= d
    return lead * subs * lanes * itemsize


def _vmem_capacity_bytes():
    try:
        info = pltpu.get_tpu_info()
        cap = getattr(info, "vmem_capacity_bytes", None)
        if cap:
            return int(cap)
    except Exception:
        pass
    return 64 << 20  # conservative fallback: v7x per-TensorCore VMEM


def _pick_batch_tile(B, L, C, coeff_itemsize, vec_itemsize, budget_bytes):
    """Largest batch tile (multiple of 8 dividing B) whose double-buffered,
    padding-aware footprint fits the budget.  If B is not a multiple of 8 the
    only legal block is the full batch (block dim == full array dim, which
    Pallas accepts without the (8,128) divisibility rule)."""
    cands = [tb for tb in range(8, B + 1, 8) if B % tb == 0]
    if not cands:
        return B

    def footprint(tb):
        ins = 8 * _padded_block_bytes((tb, L * C), coeff_itemsize)
        ins += 3 * _padded_block_bytes((tb, C), vec_itemsize)
        outs = (3 * _padded_block_bytes((tb, L + 1), 4)
                + _padded_block_bytes((tb, L), 4))
        return 2 * (ins + outs)  # double-buffered pipeline

    fits = [tb for tb in cands if footprint(tb) <= budget_bytes] or [cands[0]]
    # Prefer an even number (>=2) of grid steps so the "parallel" axis splits
    # evenly across both v7x TensorCores; on single-TC v5e/v6e this costs at
    # most one extra ~0.35us grid step.
    even = [tb for tb in fits if (B // tb) >= 2 and (B // tb) % 2 == 0]
    multi = [tb for tb in fits if (B // tb) >= 2]
    pool = even or multi or fits
    return max(pool)


# --------------------------------------------------------------------------
# Wrapper
# --------------------------------------------------------------------------
def propagation_pallas(multireflected_layers, upward_reflection_toa, input_flux,
                       *, batch_tile=None):
    """multireflected_layers: 8 arrays of shape (B, L, C) (any float dtype);
       upward_reflection_toa: (B, C); input_flux: 2 arrays of shape (B, C).
       Returns [flux_down_direct, flux_down_diffuse, flux_up_diffuse,
       flux_absorbed] with shapes (B, L+1) x3 and (B, L), float32."""
    (t_direct, t_diffuse, t_multi_direct, t_multi_diffuse,
     r_surface_multi_direct, r_surface_multi_diffuse,
     a_layer_multi_direct, a_layer_multi_diffuse) = multireflected_layers
    flux_direct, flux_diffuse = input_flux

    B, L, C = t_direct.shape

    # Native dtype, free reshape to lane-dense (B, L*C): no wrapper-side cast
    # (which would materialize a second full HBM copy) and no transpose.
    coeffs = [a.reshape(B, L * C) for a in (
        t_direct, t_diffuse, t_multi_direct, t_multi_diffuse,
        r_surface_multi_direct, r_surface_multi_diffuse,
        a_layer_multi_direct, a_layer_multi_diffuse)]

    coeff_itemsize = jnp.dtype(coeffs[0].dtype).itemsize
    vec_itemsize = jnp.dtype(flux_direct.dtype).itemsize

    vmem_cap = _vmem_capacity_bytes()
    budget = vmem_cap // 2            # ~64 MiB on v5e/v6e, ~32 MiB on v7x
    TB = (_pick_batch_tile(B, L, C, coeff_itemsize, vec_itemsize, budget)
          if batch_tile is None else batch_tile)
    assert B % TB == 0 and (TB % 8 == 0 or TB == B), (B, TB)

    # TODO(synk): after VMEM sizing, try pipeline_mode=pl.Buffered(3) on the
    # coefficient specs if the padded footprint leaves headroom.
    coeff_spec = pl.BlockSpec((TB, L * C), lambda b: (b, 0))
    vec_spec = pl.BlockSpec((TB, C), lambda b: (b, 0))
    out_spec_lp1 = pl.BlockSpec((TB, L + 1), lambda b: (b, 0))
    out_spec_l = pl.BlockSpec((TB, L), lambda b: (b, 0))

    out_shapes = [
        jax.ShapeDtypeStruct((B, L + 1), jnp.float32),  # flux_down_direct
        jax.ShapeDtypeStruct((B, L + 1), jnp.float32),  # flux_down_diffuse
        jax.ShapeDtypeStruct((B, L + 1), jnp.float32),  # flux_up_diffuse
        jax.ShapeDtypeStruct((B, L), jnp.float32),      # flux_absorbed
    ]

    # Generation-aware VMEM limit: 3/4 of physical per-TC capacity
    # (96 MiB on v5e/v6e, 48 MiB on v7x), never below 32 MiB.
    vmem_limit = int(min(max(vmem_cap * 3 // 4, 32 << 20), vmem_cap))

    kernel = functools.partial(_propagation_kernel, n_layers=L, n_channel=C)

    fn = pl.pallas_call(
        kernel,
        out_shape=out_shapes,
        grid_spec=pltpu.PrefetchScalarGridSpec(
            num_scalar_prefetch=0,
            grid=(B // TB,),
            in_specs=[coeff_spec] * 8 + [vec_spec] * 3,
            out_specs=[out_spec_lp1, out_spec_lp1, out_spec_lp1, out_spec_l],
        ),
        compiler_params=pltpu.CompilerParams(
            dimension_semantics=("parallel",),
            vmem_limit_bytes=vmem_limit),
    )
    return list(fn(*coeffs, upward_reflection_toa, flux_direct, flux_diffuse))


# --------------------------------------------------------------------------
# Pure-JAX reference (mirrors the PyTorch forward; math in f32)
# --------------------------------------------------------------------------
def propagation_ref(multireflected_layers, upward_reflection_toa, input_flux):
    layers = [a.astype(jnp.float32) for a in multireflected_layers]
    (t_direct, t_diffuse, t_multi_direct, t_multi_diffuse,
     r_sd, r_sf, a_d, a_f) = layers
    fd = input_flux[0].astype(jnp.float32)
    ff = input_flux[1].astype(jnp.float32)
    up = upward_reflection_toa.astype(jnp.float32)
    fdd, fdf, fud, fab = [fd], [ff], [fd * up], []
    for i in range(t_direct.shape[1]):
        fab.append(fd * a_d[:, i] + ff * a_f[:, i])
        fdd.append(fd * t_direct[:, i])
        fdf.append(fd * t_multi_direct[:, i]
                   + ff * (t_diffuse[:, i] + t_multi_diffuse[:, i]))
        fud.append(fd * r_sd[:, i] + ff * r_sf[:, i])
        fd, ff = fdd[-1], fdf[-1]
    red = lambda lst: jnp.sum(jnp.stack(lst, axis=1), axis=2)
    return [red(fdd), red(fdf), red(fud), red(fab)]


if __name__ == "__main__":
    B, L, C = 32, 8, 16  # batch columns, atmospheric layers, spectral channels

    key = jax.random.PRNGKey(0)
    keys = jax.random.split(key, 11)

    # Coefficients in bf16 (the streamed dtype; halves HBM bytes), flux in f32.
    multireflected_layers = tuple(
        jax.random.uniform(keys[i], (B, L, C), jnp.float32, 0.0, 1.0)
        .astype(jnp.bfloat16)
        for i in range(8)
    )
    upward_reflection_toa = jax.random.uniform(keys[8], (B, C), jnp.float32, 0.0, 1.0)
    flux_direct = jax.random.uniform(keys[9], (B, C), jnp.float32, 0.0, 1.0)
    flux_diffuse = jax.random.uniform(keys[10], (B, C), jnp.float32, 0.0, 1.0)
    input_flux = (flux_direct, flux_diffuse)

    out = jax.block_until_ready(
        propagation_pallas(multireflected_layers, upward_reflection_toa, input_flux))
    ref = jax.block_until_ready(
        propagation_ref(multireflected_layers, upward_reflection_toa, input_flux))

    for o, r in zip(out, ref):
        assert o.shape == r.shape, (o.shape, r.shape)
        err = float(jnp.max(jnp.abs(o - r)))
        assert err < 1e-4, err

    print("KERNEL_OK")
</pallas_src>

<mosaic_0001>
module attributes {stable_mosaic.version = 11 : i64} {
  func.func @_propagation_kernel(%arg0: i32, %arg1: memref<16x128xbf16, #tpu.memory_space<vmem>>, %arg2: memref<16x128xbf16, #tpu.memory_space<vmem>>, %arg3: memref<16x128xbf16, #tpu.memory_space<vmem>>, %arg4: memref<16x128xbf16, #tpu.memory_space<vmem>>, %arg5: memref<16x128xbf16, #tpu.memory_space<vmem>>, %arg6: memref<16x128xbf16, #tpu.memory_space<vmem>>, %arg7: memref<16x128xbf16, #tpu.memory_space<vmem>>, %arg8: memref<16x128xbf16, #tpu.memory_space<vmem>>, %arg9: memref<16x16xf32, #tpu.memory_space<vmem>>, %arg10: memref<16x16xf32, #tpu.memory_space<vmem>>, %arg11: memref<16x16xf32, #tpu.memory_space<vmem>>, %arg12: memref<16x9xf32, #tpu.memory_space<vmem>>, %arg13: memref<16x9xf32, #tpu.memory_space<vmem>>, %arg14: memref<16x9xf32, #tpu.memory_space<vmem>>, %arg15: memref<16x8xf32, #tpu.memory_space<vmem>>) attributes {dimension_semantics = [#tpu.dimension_semantics<parallel>], iteration_bounds = array<i64: 2>, scalar_prefetch = 0 : i64, scratch_operands = 0 : i64, tpu.core_type = #tpu.core_type<tc>, window_params = [{transform_indices = @transform_0, window_bounds = array<i64: 16, 128>}, {transform_indices = @transform_1, window_bounds = array<i64: 16, 128>}, {transform_indices = @transform_2, window_bounds = array<i64: 16, 128>}, {transform_indices = @transform_3, window_bounds = array<i64: 16, 128>}, {transform_indices = @transform_4, window_bounds = array<i64: 16, 128>}, {transform_indices = @transform_5, window_bounds = array<i64: 16, 128>}, {transform_indices = @transform_6, window_bounds = array<i64: 16, 128>}, {transform_indices = @transform_7, window_bounds = array<i64: 16, 128>}, {transform_indices = @transform_8, window_bounds = array<i64: 16, 16>}, {transform_indices = @transform_9, window_bounds = array<i64: 16, 16>}, {transform_indices = @transform_10, window_bounds = array<i64: 16, 16>}, {transform_indices = @transform_11, window_bounds = array<i64: 16, 9>}, {transform_indices = @transform_12, window_bounds = array<i64: 16, 9>}, {transform_indices = @transform_13, window_bounds = array<i64: 16, 9>}, {transform_indices = @transform_14, window_bounds = array<i64: 16, 8>}]} {
    %c0 = arith.constant 0 : index
    %c0_0 = arith.constant 0 : index
    %0 = vector.load %arg10[%c0, %c0_0] : memref<16x16xf32, #tpu.memory_space<vmem>>, vector<16x16xf32>
    %c0_1 = arith.constant 0 : index
    %c0_2 = arith.constant 0 : index
    %1 = vector.load %arg11[%c0_1, %c0_2] : memref<16x16xf32, #tpu.memory_space<vmem>>, vector<16x16xf32>
    %cst = arith.constant dense<0.000000e+00> : vector<16xf32>
    %2 = vector.multi_reduction <add>, %0, %cst [1] : vector<16x16xf32> to vector<16xf32>
    %3 = vector.shape_cast %2 : vector<16xf32> to vector<16x1xf32>
    %c0_3 = arith.constant 0 : index
    %c0_4 = arith.constant 0 : index
    %4 = vector.load %arg12[%c0_3, %c0_4] : memref<16x9xf32, #tpu.memory_space<vmem>>, vector<16x1xf32>
    tpu.vector_store %arg12[%c0_3, %c0_4], %3 {strides = array<i32>} : memref<16x9xf32, #tpu.memory_space<vmem>>, vector<16x1xf32>,
    %cst_5 = arith.constant dense<0.000000e+00> : vector<16xf32>
    %5 = vector.multi_reduction <add>, %1, %cst_5 [1] : vector<16x16xf32> to vector<16xf32>
    %6 = vector.shape_cast %5 : vector<16xf32> to vector<16x1xf32>
    %c0_6 = arith.constant 0 : index
    %c0_7 = arith.constant 0 : index
    %7 = vector.load %arg13[%c0_6, %c0_7] : memref<16x9xf32, #tpu.memory_space<vmem>>, vector<16x1xf32>
    tpu.vector_store %arg13[%c0_6, %c0_7], %6 {strides = array<i32>} : memref<16x9xf32, #tpu.memory_space<vmem>>, vector<16x1xf32>,
    %c0_8 = arith.constant 0 : index
    %c0_9 = arith.constant 0 : index
    %8 = vector.load %arg9[%c0_8, %c0_9] : memref<16x16xf32, #tpu.memory_space<vmem>>, vector<16x16xf32>
    %9 = arith.mulf %0, %8 : vector<16x16xf32>
    %cst_10 = arith.constant dense<0.000000e+00> : vector<16xf32>
    %10 = vector.multi_reduction <add>, %9, %cst_10 [1] : vector<16x16xf32> to vector<16xf32>
    %11 = vector.shape_cast %10 : vector<16xf32> to vector<16x1xf32>
    %c0_11 = arith.constant 0 : index
    %c0_12 = arith.constant 0 : index
    %12 = vector.load %arg14[%c0_11, %c0_12] : memref<16x9xf32, #tpu.memory_space<vmem>>, vector<16x1xf32>
    tpu.vector_store %arg14[%c0_11, %c0_12], %11 {strides = array<i32>} : memref<16x9xf32, #tpu.memory_space<vmem>>, vector<16x1xf32>,
    %c0_13 = arith.constant 0 : index
    %c0_14 = arith.constant 0 : index
    %13 = vector.load %arg7[%c0_13, %c0_14] : memref<16x128xbf16, #tpu.memory_space<vmem>>, vector<16x16xbf16>
    %14 = arith.extf %13 : vector<16x16xbf16> to vector<16x16xf32>
    %c0_15 = arith.constant 0 : index
    %c0_16 = arith.constant 0 : index
    %15 = vector.load %arg8[%c0_15, %c0_16] : memref<16x128xbf16, #tpu.memory_space<vmem>>, vector<16x16xbf16>
    %16 = arith.extf %15 : vector<16x16xbf16> to vector<16x16xf32>
    %c0_17 = arith.constant 0 : index
    %c0_18 = arith.constant 0 : index
    %17 = vector.load %arg5[%c0_17, %c0_18] : memref<16x128xbf16, #tpu.memory_space<vmem>>, vector<16x16xbf16>
    %18 = arith.extf %17 : vector<16x16xbf16> to vector<16x16xf32>
    %c0_19 = arith.constant 0 : index
    %c0_20 = arith.constant 0 : index
    %19 = vector.load %arg6[%c0_19, %c0_20] : memref<16x128xbf16, #tpu.memory_space<vmem>>, vector<16x16xbf16>
    %20 = arith.extf %19 : vector<16x16xbf16> to vector<16x16xf32>
    %c0_21 = arith.constant 0 : index
    %c0_22 = arith.constant 0 : index
    %21 = vector.load %arg1[%c0_21, %c0_22] : memref<16x128xbf16, #tpu.memory_space<vmem>>, vector<16x16xbf16>
    %22 = arith.extf %21 : vector<16x16xbf16> to vector<16x16xf32>
    %c0_23 = arith.constant 0 : index
    %c0_24 = arith.constant 0 : index
    %23 = vector.load %arg2[%c0_23, %c0_24] : memref<16x128xbf16, #tpu.memory_space<vmem>>, vector<16x16xbf16>
    %24 = arith.extf %23 : vector<16x16xbf16> to vector<16x16xf32>
    %c0_25 = arith.constant 0 : index
    %c0_26 = arith.constant 0 : index
    %25 = vector.load %arg3[%c0_25, %c0_26] : memref<16x128xbf16, #tpu.memory_space<vmem>>, vector<16x16xbf16>
    %26 = arith.extf %25 : vector<16x16xbf16> to vector<16x16xf32>
    %c0_27 = arith.constant 0 : index
    %c0_28 = arith.constant 0 : index
    %27 = vector.load %arg4[%c0_27, %c0_28] : memref<16x128xbf16, #tpu.memory_space<vmem>>, vector<16x16xbf16>
    %28 = arith.extf %27 : vector<16x16xbf16> to vector<16x16xf32>
    %29 = arith.mulf %0, %14 : vector<16x16xf32>
    %30 = arith.mulf %1, %16 : vector<16x16xf32>
    %31 = arith.addf %29, %30 : vector<16x16xf32>
    %cst_29 = arith.constant dense<0.000000e+00> : vector<16xf32>
    %32 = vector.multi_reduction <add>, %31, %cst_29 [1] : vector<16x16xf32> to vector<16xf32>
    %33 = vector.shape_cast %32 : vector<16xf32> to vector<16x1xf32>
    %c0_30 = arith.constant 0 : index
    %c0_31 = arith.constant 0 : index
    %34 = vector.load %arg15[%c0_30, %c0_31] : memref<16x8xf32, #tpu.memory_space<vmem>>, vector<16x1xf32>
    tpu.vector_store %arg15[%c0_30, %c0_31], %33 {strides = array<i32>} : memref<16x8xf32, #tpu.memory_space<vmem>>, vector<16x1xf32>,
    %35 = arith.mulf %0, %18 : vector<16x16xf32>
    %36 = arith.mulf %1, %20 : vector<16x16xf32>
    %37 = arith.addf %35, %36 : vector<16x16xf32>
    %cst_32 = arith.constant dense<0.000000e+00> : vector<16xf32>
    %38 = vector.multi_reduction <add>, %37, %cst_32 [1] : vector<16x16xf32> to vector<16xf32>
    %39 = vector.shape_cast %38 : vector<16xf32> to vector<16x1xf32>
    %c0_33 = arith.constant 0 : index
    %c1 = arith.constant 1 : index
    %40 = vector.load %arg14[%c0_33, %c1] : memref<16x9xf32, #tpu.memory_space<vmem>>, vector<16x1xf32>
    tpu.vector_store %arg14[%c0_33, %c1], %39 {strides = array<i32>} : memref<16x9xf32, #tpu.memory_space<vmem>>, vector<16x1xf32>,
    %41 = arith.mulf %0, %22 : vector<16x16xf32>
    %42 = arith.mulf %0, %26 : vector<16x16xf32>
    %43 = arith.addf %24, %28 : vector<16x16xf32>
    %44 = arith.mulf %1, %43 : vector<16x16xf32>
    %45 = arith.addf %42, %44 : vector<16x16xf32>
    %cst_34 = arith.constant dense<0.000000e+00> : vector<16xf32>
    %46 = vector.multi_reduction <add>, %41, %cst_34 [1] : vector<16x16xf32> to vector<16xf32>
    %47 = vector.shape_cast %46 : vector<16xf32> to vector<16x1xf32>
    %c0_35 = arith.constant 0 : index
    %c1_36 = arith.constant 1 : index
    %48 = vector.load %arg12[%c0_35, %c1_36] : memref<16x9xf32, #tpu.memory_space<vmem>>, vector<16x1xf32>
    tpu.vector_store %arg12[%c0_35, %c1_36], %47 {strides = array<i32>} : memref<16x9xf32, #tpu.memory_space<vmem>>, vector<16x1xf32>,
    %cst_37 = arith.constant dense<0.000000e+00> : vector<16xf32>
    %49 = vector.multi_reduction <add>, %45, %cst_37 [1] : vector<16x16xf32> to vector<16xf32>
    %50 = vector.shape_cast %49 : vector<16xf32> to vector<16x1xf32>
    %c0_38 = arith.constant 0 : index
    %c1_39 = arith.constant 1 : index
    %51 = vector.load %arg13[%c0_38, %c1_39] : memref<16x9xf32, #tpu.memory_space<vmem>>, vector<16x1xf32>
    tpu.vector_store %arg13[%c0_38, %c1_39], %50 {strides = array<i32>} : memref<16x9xf32, #tpu.memory_space<vmem>>, vector<16x1xf32>,
    %c0_40 = arith.constant 0 : index
    %c16 = arith.constant 16 : index
    %52 = vector.load %arg7[%c0_40, %c16] : memref<16x128xbf16, #tpu.memory_space<vmem>>, vector<16x16xbf16>
    %53 = arith.extf %52 : vector<16x16xbf16> to vector<16x16xf32>
    %c0_41 = arith.constant 0 : index
    %c16_42 = arith.constant 16 : index
    %54 = vector.load %arg8[%c0_41, %c16_42] : memref<16x128xbf16, #tpu.memory_space<vmem>>, vector<16x16xbf16>
    %55 = arith.extf %54 : vector<16x16xbf16> to vector<16x16xf32>
    %c0_43 = arith.constant 0 : index
    %c16_44 = arith.constant 16 : index
    %56 = vector.load %arg5[%c0_43, %c16_44] : memref<16x128xbf16, #tpu.memory_space<vmem>>, vector<16x16xbf16>
    %57 = arith.extf %56 : vector<16x16xbf16> to vector<16x16xf32>
    %c0_45 = arith.constant 0 : index
    %c16_46 = arith.constant 16 : index
    %58 = vector.load %arg6[%c0_45, %c16_46] : memref<16x128xbf16, #tpu.memory_space<vmem>>, vector<16x16xbf16>
    %59 = arith.extf %58 : vector<16x16xbf16> to vector<16x16xf32>
    %c0_47 = arith.constant 0 : index
    %c16_48 = arith.constant 16 : index
    %60 = vector.load %arg1[%c0_47, %c16_48] : memref<16x128xbf16, #tpu.memory_space<vmem>>, vector<16x16xbf16>
    %61 = arith.extf %60 : vector<16x16xbf16> to vector<16x16xf32>
    %c0_49 = arith.constant 0 : index
    %c16_50 = arith.constant 16 : index
    %62 = vector.load %arg2[%c0_49, %c16_50] : memref<16x128xbf16, #tpu.memory_space<vmem>>, vector<16x16xbf16>
    %63 = arith.extf %62 : vector<16x16xbf16> to vector<16x16xf32>
    %c0_51 = arith.constant 0 : index
    %c16_52 = arith.constant 16 : index
    %64 = vector.load %arg3[%c0_51, %c16_52] : memref<16x128xbf16, #tpu.memory_space<vmem>>, vector<16x16xbf16>
    %65 = arith.extf %64 : vector<16x16xbf16> to vector<16x16xf32>
    %c0_53 = arith.constant 0 : index
    %c16_54 = arith.constant 16 : index
    %66 = vector.load %arg4[%c0_53, %c16_54] : memref<16x128xbf16, #tpu.memory_space<vmem>>, vector<16x16xbf16>
    %67 = arith.extf %66 : vector<16x16xbf16> to vector<16x16xf32>
    %68 = arith.mulf %41, %53 : vector<16x16xf32>
    %69 = arith.mulf %45, %55 : vector<16x16xf32>
    %70 = arith.addf %68, %69 : vector<16x16xf32>
    %cst_55 = arith.constant dense<0.000000e+00> : vector<16xf32>
    %71 = vector.multi_reduction <add>, %70, %cst_55 [1] : vector<16x16xf32> to vector<16xf32>
    %72 = vector.shape_cast %71 : vector<16xf32> to vector<16x1xf32>
    %c0_56 = arith.constant 0 : index
    %c1_57 = arith.constant 1 : index
    %73 = vector.load %arg15[%c0_56, %c1_57] : memref<16x8xf32, #tpu.memory_space<vmem>>, vector<16x1xf32>
    tpu.vector_store %arg15[%c0_56, %c1_57], %72 {strides = array<i32>} : memref<16x8xf32, #tpu.memory_space<vmem>>, vector<16x1xf32>,
    %74 = arith.mulf %41, %57 : vector<16x16xf32>
    %75 = arith.mulf %45, %59 : vector<16x16xf32>
    %76 = arith.addf %74, %75 : vector<16x16xf32>
    %cst_58 = arith.constant dense<0.000000e+00> : vector<16xf32>
    %77 = vector.multi_reduction <add>, %76, %cst_58 [1] : vector<16x16xf32> to vector<16xf32>
    %78 = vector.shape_cast %77 : vector<16xf32> to vector<16x1xf32>
    %c0_59 = arith.constant 0 : index
    %c2 = arith.constant 2 : index
    %79 = vector.load %arg14[%c0_59, %c2] : memref<16x9xf32, #tpu.memory_space<vmem>>, vector<16x1xf32>
    tpu.vector_store %arg14[%c0_59, %c2], %78 {strides = array<i32>} : memref<16x9xf32, #tpu.memory_space<vmem>>, vector<16x1xf32>,
    %80 = arith.mulf %41, %61 : vector<16x16xf32>
    %81 = arith.mulf %41, %65 : vector<16x16xf32>
    %82 = arith.addf %63, %67 : vector<16x16xf32>
    %83 = arith.mulf %45, %82 : vector<16x16xf32>
    %84 = arith.addf %81, %83 : vector<16x16xf32>
    %cst_60 = arith.constant dense<0.000000e+00> : vector<16xf32>
    %85 = vector.multi_reduction <add>, %80, %cst_60 [1] : vector<16x16xf32> to vector<16xf32>
    %86 = vector.shape_cast %85 : vector<16xf32> to vector<16x1xf32>
    %c0_61 = arith.constant 0 : index
    %c2_62 = arith.constant 2 : index
    %87 = vector.load %arg12[%c0_61, %c2_62] : memref<16x9xf32, #tpu.memory_space<vmem>>, vector<16x1xf32>
    tpu.vector_store %arg12[%c0_61, %c2_62], %86 {strides = array<i32>} : memref<16x9xf32, #tpu.memory_space<vmem>>, vector<16x1xf32>,
    %cst_63 = arith.constant dense<0.000000e+00> : vector<16xf32>
    %88 = vector.multi_reduction <add>, %84, %cst_63 [1] : vector<16x16xf32> to vector<16xf32>
    %89 = vector.shape_cast %88 : vector<16xf32> to vector<16x1xf32>
    %c0_64 = arith.constant 0 : index
    %c2_65 = arith.constant 2 : index
    %90 = vector.load %arg13[%c0_64, %c2_65] : memref<16x9xf32, #tpu.memory_space<vmem>>, vector<16x1xf32>
    tpu.vector_store %arg13[%c0_64, %c2_65], %89 {strides = array<i32>} : memref<16x9xf32, #tpu.memory_space<vmem>>, vector<16x1xf32>,
    %c0_66 = arith.constant 0 : index
    %c32 = arith.constant 32 : index
    %91 = vector.load %arg7[%c0_66, %c32] : memref<16x128xbf16, #tpu.memory_space<vmem>>, vector<16x16xbf16>
    %92 = arith.extf %91 : vector<16x16xbf16> to vector<16x16xf32>
    %c0_67 = arith.constant 0 : index
    %c32_68 = arith.constant 32 : index
    %93 = vector.load %arg8[%c0_67, %c32_68] : memref<16x128xbf16, #tpu.memory_space<vmem>>, vector<16x16xbf16>
    %94 = arith.extf %93 : vector<16x16xbf16> to vector<16x16xf32>
    %c0_69 = arith.constant 0 : index
    %c32_70 = arith.constant 32 : index
    %95 = vector.load %arg5[%c0_69, %c32_70] : memref<16x128xbf16, #tpu.memory_space<vmem>>, vector<16x16xbf16>
    %96 = arith.extf %95 : vector<16x16xbf16> to vector<16x16xf32>
    %c0_71 = arith.constant 0 : index
    %c32_72 = arith.constant 32 : index
    %97 = vector.load %arg6[%c0_71, %c32_72] : memref<16x128xbf16, #tpu.memory_space<vmem>>, vector<16x16xbf16>
    %98 = arith.extf %97 : vector<16x16xbf16> to vector<16x16xf32>
    %c0_73 = arith.constant 0 : index
    %c32_74 = arith.constant 32 : index
    %99 = vector.load %arg1[%c0_73, %c32_74] : memref<16x128xbf16, #tpu.memory_space<vmem>>, vector<16x16xbf16>
    %100 = arith.extf %99 : vector<16x16xbf16> to vector<16x16xf32>
    %c0_75 = arith.constant 0 : index
    %c32_76 = arith.constant 32 : index
    %101 = vector.load %arg2[%c0_75, %c32_76] : memref<16x128xbf16, #tpu.memory_space<vmem>>, vector<16x16xbf16>
    %102 = arith.extf %101 : vector<16x16xbf16> to vector<16x16xf32>
    %c0_77 = arith.constant 0 : index
    %c32_78 = arith.constant 32 : index
    %103 = vector.load %arg3[%c0_77, %c32_78] : memref<16x128xbf16, #tpu.memory_space<vmem>>, vector<16x16xbf16>
    %104 = arith.extf %103 : vector<16x16xbf16> to vector<16x16xf32>
    %c0_79 = arith.constant 0 : index
    %c32_80 = arith.constant 32 : index
    %105 = vector.load %arg4[%c0_79, %c32_80] : memref<16x128xbf16, #tpu.memory_space<vmem>>, vector<16x16xbf16>
    %106 = arith.extf %105 : vector<16x16xbf16> to vector<16x16xf32>
    %107 = arith.mulf %80, %92 : vector<16x16xf32>
    %108 = arith.mulf %84, %94 : vector<16x16xf32>
    %109 = arith.addf %107, %108 : vector<16x16xf32>
    %cst_81 = arith.constant dense<0.000000e+00> : vector<16xf32>
    %110 = vector.multi_reduction <add>, %109, %cst_81 [1] : vector<16x16xf32> to vector<16xf32>
    %111 = vector.shape_cast %110 : vector<16xf32> to vector<16x1xf32>
    %c0_82 = arith.constant 0 : index
    %c2_83 = arith.constant 2 : index
    %112 = vector.load %arg15[%c0_82, %c2_83] : memref<16x8xf32, #tpu.memory_space<vmem>>, vector<16x1xf32>
    tpu.vector_store %arg15[%c0_82, %c2_83], %111 {strides = array<i32>} : memref<16x8xf32, #tpu.memory_space<vmem>>, vector<16x1xf32>,
    %113 = arith.mulf %80, %96 : vector<16x16xf32>
    %114 = arith.mulf %84, %98 : vector<16x16xf32>
    %115 = arith.addf %113, %114 : vector<16x16xf32>
    %cst_84 = arith.constant dense<0.000000e+00> : vector<16xf32>
    %116 = vector.multi_reduction <add>, %115, %cst_84 [1] : vector<16x16xf32> to vector<16xf32>
    %117 = vector.shape_cast %116 : vector<16xf32> to vector<16x1xf32>
    %c0_85 = arith.constant 0 : index
    %c3 = arith.constant 3 : index
    %118 = vector.load %arg14[%c0_85, %c3] : memref<16x9xf32, #tpu.memory_space<vmem>>, vector<16x1xf32>
    tpu.vector_store %arg14[%c0_85, %c3], %117 {strides = array<i32>} : memref<16x9xf32, #tpu.memory_space<vmem>>, vector<16x1xf32>,
    %119 = arith.mulf %80, %100 : vector<16x16xf32>
    %120 = arith.mulf %80, %104 : vector<16x16xf32>
    %121 = arith.addf %102, %106 : vector<16x16xf32>
    %122 = arith.mulf %84, %121 : vector<16x16xf32>
    %123 = arith.addf %120, %122 : vector<16x16xf32>
    %cst_86 = arith.constant dense<0.000000e+00> : vector<16xf32>
    %124 = vector.multi_reduction <add>, %119, %cst_86 [1] : vector<16x16xf32> to vector<16xf32>
    %125 = vector.shape_cast %124 : vector<16xf32> to vector<16x1xf32>
    %c0_87 = arith.constant 0 : index
    %c3_88 = arith.constant 3 : index
    %126 = vector.load %arg12[%c0_87, %c3_88] : memref<16x9xf32, #tpu.memory_space<vmem>>, vector<16x1xf32>
    tpu.vector_store %arg12[%c0_87, %c3_88], %125 {strides = array<i32>} : memref<16x9xf32, #tpu.memory_space<vmem>>, vector<16x1xf32>,
    %cst_89 = arith.constant dense<0.000000e+00> : vector<16xf32>
    %127 = vector.multi_reduction <add>, %123, %cst_89 [1] : vector<16x16xf32> to vector<16xf32>
    %128 = vector.shape_cast %127 : vector<16xf32> to vector<16x1xf32>
    %c0_90 = arith.constant 0 : index
    %c3_91 = arith.constant 3 : index
    %129 = vector.load %arg13[%c0_90, %c3_91] : memref<16x9xf32, #tpu.memory_space<vmem>>, vector<16x1xf32>
    tpu.vector_store %arg13[%c0_90, %c3_91], %128 {strides = array<i32>} : memref<16x9xf32, #tpu.memory_space<vmem>>, vector<16x1xf32>,
    %c0_92 = arith.constant 0 : index
    %c48 = arith.constant 48 : index
    %130 = vector.load %arg7[%c0_92, %c48] : memref<16x128xbf16, #tpu.memory_space<vmem>>, vector<16x16xbf16>
    %131 = arith.extf %130 : vector<16x16xbf16> to vector<16x16xf32>
    %c0_93 = arith.constant 0 : index
    %c48_94 = arith.constant 48 : index
    %132 = vector.load %arg8[%c0_93, %c48_94] : memref<16x128xbf16, #tpu.memory_space<vmem>>, vector<16x16xbf16>
    %133 = arith.extf %132 : vector<16x16xbf16> to vector<16x16xf32>
    %c0_95 = arith.constant 0 : index
    %c48_96 = arith.constant 48 : index
    %134 = vector.load %arg5[%c0_95, %c48_96] : memref<16x128xbf16, #tpu.memory_space<vmem>>, vector<16x16xbf16>
    %135 = arith.extf %134 : vector<16x16xbf16> to vector<16x16xf32>
    %c0_97 = arith.constant 0 : index
    %c48_98 = arith.constant 48 : index
    %136 = vector.load %arg6[%c0_97, %c48_98] : memref<16x128xbf16, #tpu.memory_space<vmem>>, vector<16x16xbf16>
    %137 = arith.extf %136 : vector<16x16xbf16> to vector<16x16xf32>
    %c0_99 = arith.constant 0 : index
    %c48_100 = arith.constant 48 : index
    %138 = vector.load %arg1[%c0_99, %c48_100] : memref<16x128xbf16, #tpu.memory_space<vmem>>, vector<16x16xbf16>
    %139 = arith.extf %138 : vector<16x16xbf16> to vector<16x16xf32>
    %c0_101 = arith.constant 0 : index
    %c48_102 = arith.constant 48 : index
    %140 = vector.load %arg2[%c0_101, %c48_102] : memref<16x128xbf16, #tpu.memory_space<vmem>>, vector<16x16xbf16>
    %141 = arith.extf %140 : vector<16x16xbf16> to vector<16x16xf32>
    %c0_103 = arith.constant 0 : index
    %c48_104 = arith.constant 48 : index
    %142 = vector.load %arg3[%c0_103, %c48_104] : memref<16x128xbf16, #tpu.memory_space<vmem>>, vector<16x16xbf16>
    %143 = arith.extf %142 : vector<16x16xbf16> to vector<16x16xf32>
    %c0_105 = arith.constant 0 : index
    %c48_106 = arith.constant 48 : index
    %144 = vector.load %arg4[%c0_105, %c48_106] : memref<16x128xbf16, #tpu.memory_space<vmem>>, vector<16x16xbf16>
    %145 = arith.extf %144 : vector<16x16xbf16> to vector<16x16xf32>
    %146 = arith.mulf %119, %131 : vector<16x16xf32>
    %147 = arith.mulf %123, %133 : vector<16x16xf32>
    %148 = arith.addf %146, %147 : vector<16x16xf32>
    %cst_107 = arith.constant dense<0.000000e+00> : vector<16xf32>
    %149 = vector.multi_reduction <add>, %148, %cst_107 [1] : vector<16x16xf32> to vector<16xf32>
    %150 = vector.shape_cast %149 : vector<16xf32> to vector<16x1xf32>
    %c0_108 = arith.constant 0 : index
    %c3_109 = arith.constant 3 : index
    %151 = vector.load %arg15[%c0_108, %c3_109] : memref<16x8xf32, #tpu.memory_space<vmem>>, vector<16x1xf32>
    tpu.vector_store %arg15[%c0_108, %c3_109], %150 {strides = array<i32>} : memref<16x8xf32, #tpu.memory_space<vmem>>, vector<16x1xf32>,
    %152 = arith.mulf %119, %135 : vector<16x16xf32>
    %153 = arith.mulf %123, %137 : vector<16x16xf32>
    %154 = arith.addf %152, %153 : vector<16x16xf32>
    %cst_110 = arith.constant dense<0.000000e+00> : vector<16xf32>
    %155 = vector.multi_reduction <add>, %154, %cst_110 [1] : vector<16x16xf32> to vector<16xf32>
    %156 = vector.shape_cast %155 : vector<16xf32> to vector<16x1xf32>
    %c0_111 = arith.constant 0 : index
    %c4 = arith.constant 4 : index
    %157 = vector.load %arg14[%c0_111, %c4] : memref<16x9xf32, #tpu.memory_space<vmem>>, vector<16x1xf32>
    tpu.vector_store %arg14[%c0_111, %c4], %156 {strides = array<i32>} : memref<16x9xf32, #tpu.memory_space<vmem>>, vector<16x1xf32>,
    %158 = arith.mulf %119, %139 : vector<16x16xf32>
    %159 = arith.mulf %119, %143 : vector<16x16xf32>
    %160 = arith.addf %141, %145 : vector<16x16xf32>
    %161 = arith.mulf %123, %160 : vector<16x16xf32>
    %162 = arith.addf %159, %161 : vector<16x16xf32>
    %cst_112 = arith.constant dense<0.000000e+00> : vector<16xf32>
    %163 = vector.multi_reduction <add>, %158, %cst_112 [1] : vector<16x16xf32> to vector<16xf32>
    %164 = vector.shape_cast %163 : vector<16xf32> to vector<16x1xf32>
    %c0_113 = arith.constant 0 : index
    %c4_114 = arith.constant 4 : index
    %165 = vector.load %arg12[%c0_113, %c4_114] : memref<16x9xf32, #tpu.memory_space<vmem>>, vector<16x1xf32>
    tpu.vector_store %arg12[%c0_113, %c4_114], %164 {strides = array<i32>} : memref<16x9xf32, #tpu.memory_space<vmem>>, vector<16x1xf32>,
    %cst_115 = arith.constant dense<0.000000e+00> : vector<16xf32>
    %166 = vector.multi_reduction <add>, %162, %cst_115 [1] : vector<16x16xf32> to vector<16xf32>
    %167 = vector.shape_cast %166 : vector<16xf32> to vector<16x1xf32>
    %c0_116 = arith.constant 0 : index
    %c4_117 = arith.constant 4 : index
    %168 = vector.load %arg13[%c0_116, %c4_117] : memref<16x9xf32, #tpu.memory_space<vmem>>, vector<16x1xf32>
    tpu.vector_store %arg13[%c0_116, %c4_117], %167 {strides = array<i32>} : memref<16x9xf32, #tpu.memory_space<vmem>>, vector<16x1xf32>,
    %c0_118 = arith.constant 0 : index
    %c64 = arith.constant 64 : index
    %169 = vector.load %arg7[%c0_118, %c64] : memref<16x128xbf16, #tpu.memory_space<vmem>>, vector<16x16xbf16>
    %170 = arith.extf %169 : vector<16x16xbf16> to vector<16x16xf32>
    %c0_119 = arith.constant 0 : index
    %c64_120 = arith.constant 64 : index
    %171 = vector.load %arg8[%c0_119, %c64_120] : memref<16x128xbf16, #tpu.memory_space<vmem>>, vector<16x16xbf16>
    %172 = arith.extf %171 : vector<16x16xbf16> to vector<16x16xf32>
    %c0_121 = arith.constant 0 : index
    %c64_122 = arith.constant 64 : index
    %173 = vector.load %arg5[%c0_121, %c64_122] : memref<16x128xbf16, #tpu.memory_space<vmem>>, vector<16x16xbf16>
    %174 = arith.extf %173 : vector<16x16xbf16> to vector<16x16xf32>
    %c0_123 = arith.constant 0 : index
    %c64_124 = arith.constant 64 : index
    %175 = vector.load %arg6[%c0_123, %c64_124] : memref<16x128xbf16, #tpu.memory_space<vmem>>, vector<16x16xbf16>
    %176 = arith.extf %175 : vector<16x16xbf16> to vector<16x16xf32>
    %c0_125 = arith.constant 0 : index
    %c64_126 = arith.constant 64 : index
    %177 = vector.load %arg1[%c0_125, %c64_126] : memref<16x128xbf16, #tpu.memory_space<vmem>>, vector<16x16xbf16>
    %178 = arith.extf %177 : vector<16x16xbf16> to vector<16x16xf32>
    %c0_127 = arith.constant 0 : index
    %c64_128 = arith.constant 64 : index
    %179 = vector.load %arg2[%c0_127, %c64_128] : memref<16x128xbf16, #tpu.memory_space<vmem>>, vector<16x16xbf16>
    %180 = arith.extf %179 : vector<16x16xbf16> to vector<16x16xf32>
    %c0_129 = arith.constant 0 : index
    %c64_130 = arith.constant 64 : index
    %181 = vector.load %arg3[%c0_129, %c64_130] : memref<16x128xbf16, #tpu.memory_space<vmem>>, vector<16x16xbf16>
    %182 = arith.extf %181 : vector<16x16xbf16> to vector<16x16xf32>
    %c0_131 = arith.constant 0 : index
    %c64_132 = arith.constant 64 : index
    %183 = vector.load %arg4[%c0_131, %c64_132] : memref<16x128xbf16, #tpu.memory_space<vmem>>, vector<16x16xbf16>
    %184 = arith.extf %183 : vector<16x16xbf16> to vector<16x16xf32>
    %185 = arith.mulf %158, %170 : vector<16x16xf32>
    %186 = arith.mulf %162, %172 : vector<16x16xf32>
    %187 = arith.addf %185, %186 : vector<16x16xf32>
    %cst_133 = arith.constant dense<0.000000e+00> : vector<16xf32>
    %188 = vector.multi_reduction <add>, %187, %cst_133 [1] : vector<16x16xf32> to vector<16xf32>
    %189 = vector.shape_cast %188 : vector<16xf32> to vector<16x1xf32>
    %c0_134 = arith.constant 0 : index
    %c4_135 = arith.constant 4 : index
    %190 = vector.load %arg15[%c0_134, %c4_135] : memref<16x8xf32, #tpu.memory_space<vmem>>, vector<16x1xf32>
    tpu.vector_store %arg15[%c0_134, %c4_135], %189 {strides = array<i32>} : memref<16x8xf32, #tpu.memory_space<vmem>>, vector<16x1xf32>,
    %191 = arith.mulf %158, %174 : vector<16x16xf32>
    %192 = arith.mulf %162, %176 : vector<16x16xf32>
    %193 = arith.addf %191, %192 : vector<16x16xf32>
    %cst_136 = arith.constant dense<0.000000e+00> : vector<16xf32>
    %194 = vector.multi_reduction <add>, %193, %cst_136 [1] : vector<16x16xf32> to vector<16xf32>
    %195 = vector.shape_cast %194 : vector<16xf32> to vector<16x1xf32>
    %c0_137 = arith.constant 0 : index
    %c5 = arith.constant 5 : index
    %196 = vector.load %arg14[%c0_137, %c5] : memref<16x9xf32, #tpu.memory_space<vmem>>, vector<16x1xf32>
    tpu.vector_store %arg14[%c0_137, %c5], %195 {strides = array<i32>} : memref<16x9xf32, #tpu.memory_space<vmem>>, vector<16x1xf32>,
    %197 = arith.mulf %158, %178 : vector<16x16xf32>
    %198 = arith.mulf %158, %182 : vector<16x16xf32>
    %199 = arith.addf %180, %184 : vector<16x16xf32>
    %200 = arith.mulf %162, %199 : vector<16x16xf32>
    %201 = arith.addf %198, %200 : vector<16x16xf32>
    %cst_138 = arith.constant dense<0.000000e+00> : vector<16xf32>
    %202 = vector.multi_reduction <add>, %197, %cst_138 [1] : vector<16x16xf32> to vector<16xf32>
    %203 = vector.shape_cast %202 : vector<16xf32> to vector<16x1xf32>
    %c0_139 = arith.constant 0 : index
    %c5_140 = arith.constant 5 : index
    %204 = vector.load %arg12[%c0_139, %c5_140] : memref<16x9xf32, #tpu.memory_space<vmem>>, vector<16x1xf32>
    tpu.vector_store %arg12[%c0_139, %c5_140], %203 {strides = array<i32>} : memref<16x9xf32, #tpu.memory_space<vmem>>, vector<16x1xf32>,
    %cst_141 = arith.constant dense<0.000000e+00> : vector<16xf32>
    %205 = vector.multi_reduction <add>, %201, %cst_141 [1] : vector<16x16xf32> to vector<16xf32>
    %206 = vector.shape_cast %205 : vector<16xf32> to vector<16x1xf32>
    %c0_142 = arith.constant 0 : index
    %c5_143 = arith.constant 5 : index
    %207 = vector.load %arg13[%c0_142, %c5_143] : memref<16x9xf32, #tpu.memory_space<vmem>>, vector<16x1xf32>
    tpu.vector_store %arg13[%c0_142, %c5_143], %206 {strides = array<i32>} : memref<16x9xf32, #tpu.memory_space<vmem>>, vector<16x1xf32>,
    %c0_144 = arith.constant 0 : index
    %c80 = arith.constant 80 : index
    %208 = vector.load %arg7[%c0_144, %c80] : memref<16x128xbf16, #tpu.memory_space<vmem>>, vector<16x16xbf16>
    %209 = arith.extf %208 : vector<16x16xbf16> to vector<16x16xf32>
    %c0_145 = arith.constant 0 : index
    %c80_146 = arith.constant 80 : index
    %210 = vector.load %arg8[%c0_145, %c80_146] : memref<16x128xbf16, #tpu.memory_space<vmem>>, vector<16x16xbf16>
    %211 = arith.extf %210 : vector<16x16xbf16> to vector<16x16xf32>
    %c0_147 = arith.constant 0 : index
    %c80_148 = arith.constant 80 : index
    %212 = vector.load %arg5[%c0_147, %c80_148] : memref<16x128xbf16, #tpu.memory_space<vmem>>, vector<16x16xbf16>
    %213 = arith.extf %212 : vector<16x16xbf16> to vector<16x16xf32>
    %c0_149 = arith.constant 0 : index
    %c80_150 = arith.constant 80 : index
    %214 = vector.load %arg6[%c0_149, %c80_150] : memref<16x128xbf16, #tpu.memory_space<vmem>>, vector<16x16xbf16>
    %215 = arith.extf %214 : vector<16x16xbf16> to vector<16x16xf32>
    %c0_151 = arith.constant 0 : index
    %c80_152 = arith.constant 80 : index
    %216 = vector.load %arg1[%c0_151, %c80_152] : memref<16x128xbf16, #tpu.memory_space<vmem>>, vector<16x16xbf16>
    %217 = arith.extf %216 : vector<16x16xbf16> to vector<16x16xf32>
    %c0_153 = arith.constant 0 : index
    %c80_154 = arith.constant 80 : index
    %218 = vector.load %arg2[%c0_153, %c80_154] : memref<16x128xbf16, #tpu.memory_space<vmem>>, vector<16x16xbf16>
    %219 = arith.extf %218 : vector<16x16xbf16> to vector<16x16xf32>
    %c0_155 = arith.constant 0 : index
    %c80_156 = arith.constant 80 : index
    %220 = vector.load %arg3[%c0_155, %c80_156] : memref<16x128xbf16, #tpu.memory_space<vmem>>, vector<16x16xbf16>
    %221 = arith.extf %220 : vector<16x16xbf16> to vector<16x16xf32>
    %c0_157 = arith.constant 0 : index
    %c80_158 = arith.constant 80 : index
    %222 = vector.load %arg4[%c0_157, %c80_158] : memref<16x128xbf16, #tpu.memory_space<vmem>>, vector<16x16xbf16>
    %223 = arith.extf %222 : vector<16x16xbf16> to vector<16x16xf32>
    %224 = arith.mulf %197, %209 : vector<16x16xf32>
    %225 = arith.mulf %201, %211 : vector<16x16xf32>
    %226 = arith.addf %224, %225 : vector<16x16xf32>
    %cst_159 = arith.constant dense<0.000000e+00> : vector<16xf32>
    %227 = vector.multi_reduction <add>, %226, %cst_159 [1] : vector<16x16xf32> to vector<16xf32>
    %228 = vector.shape_cast %227 : vector<16xf32> to vector<16x1xf32>
    %c0_160 = arith.constant 0 : index
    %c5_161 = arith.constant 5 : index
    %229 = vector.load %arg15[%c0_160, %c5_161] : memref<16x8xf32, #tpu.memory_space<vmem>>, vector<16x1xf32>
    tpu.vector_store %arg15[%c0_160, %c5_161], %228 {strides = array<i32>} : memref<16x8xf32, #tpu.memory_space<vmem>>, vector<16x1xf32>,
    %230 = arith.mulf %197, %213 : vector<16x16xf32>
    %231 = arith.mulf %201, %215 : vector<16x16xf32>
    %232 = arith.addf %230, %231 : vector<16x16xf32>
    %cst_162 = arith.constant dense<0.000000e+00> : vector<16xf32>
    %233 = vector.multi_reduction <add>, %232, %cst_162 [1] : vector<16x16xf32> to vector<16xf32>
    %234 = vector.shape_cast %233 : vector<16xf32> to vector<16x1xf32>
    %c0_163 = arith.constant 0 : index
    %c6 = arith.constant 6 : index
    %235 = vector.load %arg14[%c0_163, %c6] : memref<16x9xf32, #tpu.memory_space<vmem>>, vector<16x1xf32>
    tpu.vector_store %arg14[%c0_163, %c6], %234 {strides = array<i32>} : memref<16x9xf32, #tpu.memory_space<vmem>>, vector<16x1xf32>,
    %236 = arith.mulf %197, %217 : vector<16x16xf32>
    %237 = arith.mulf %197, %221 : vector<16x16xf32>
    %238 = arith.addf %219, %223 : vector<16x16xf32>
    %239 = arith.mulf %201, %238 : vector<16x16xf32>
    %240 = arith.addf %237, %239 : vector<16x16xf32>
    %cst_164 = arith.constant dense<0.000000e+00> : vector<16xf32>
    %241 = vector.multi_reduction <add>, %236, %cst_164 [1] : vector<16x16xf32> to vector<16xf32>
    %242 = vector.shape_cast %241 : vector<16xf32> to vector<16x1xf32>
    %c0_165 = arith.constant 0 : index
    %c6_166 = arith.constant 6 : index
    %243 = vector.load %arg12[%c0_165, %c6_166] : memref<16x9xf32, #tpu.memory_space<vmem>>, vector<16x1xf32>
    tpu.vector_store %arg12[%c0_165, %c6_166], %242 {strides = array<i32>} : memref<16x9xf32, #tpu.memory_space<vmem>>, vector<16x1xf32>,
    %cst_167 = arith.constant dense<0.000000e+00> : vector<16xf32>
    %244 = vector.multi_reduction <add>, %240, %cst_167 [1] : vector<16x16xf32> to vector<16xf32>
    %245 = vector.shape_cast %244 : vector<16xf32> to vector<16x1xf32>
    %c0_168 = arith.constant 0 : index
    %c6_169 = arith.constant 6 : index
    %246 = vector.load %arg13[%c0_168, %c6_169] : memref<16x9xf32, #tpu.memory_space<vmem>>, vector<16x1xf32>
    tpu.vector_store %arg13[%c0_168, %c6_169], %245 {strides = array<i32>} : memref<16x9xf32, #tpu.memory_space<vmem>>, vector<16x1xf32>,
    %c0_170 = arith.constant 0 : index
    %c96 = arith.constant 96 : index
    %247 = vector.load %arg7[%c0_170, %c96] : memref<16x128xbf16, #tpu.memory_space<vmem>>, vector<16x16xbf16>
    %248 = arith.extf %247 : vector<16x16xbf16> to vector<16x16xf32>
    %c0_171 = arith.constant 0 : index
    %c96_172 = arith.constant 96 : index
    %249 = vector.load %arg8[%c0_171, %c96_172] : memref<16x128xbf16, #tpu.memory_space<vmem>>, vector<16x16xbf16>
    %250 = arith.extf %249 : vector<16x16xbf16> to vector<16x16xf32>
    %c0_173 = arith.constant 0 : index
    %c96_174 = arith.constant 96 : index
    %251 = vector.load %arg5[%c0_173, %c96_174] : memref<16x128xbf16, #tpu.memory_space<vmem>>, vector<16x16xbf16>
    %252 = arith.extf %251 : vector<16x16xbf16> to vector<16x16xf32>
    %c0_175 = arith.constant 0 : index
    %c96_176 = arith.constant 96 : index
    %253 = vector.load %arg6[%c0_175, %c96_176] : memref<16x128xbf16, #tpu.memory_space<vmem>>, vector<16x16xbf16>
    %254 = arith.extf %253 : vector<16x16xbf16> to vector<16x16xf32>
    %c0_177 = arith.constant 0 : index
    %c96_178 = arith.constant 96 : index
    %255 = vector.load %arg1[%c0_177, %c96_178] : memref<16x128xbf16, #tpu.memory_space<vmem>>, vector<16x16xbf16>
    %256 = arith.extf %255 : vector<16x16xbf16> to vector<16x16xf32>
    %c0_179 = arith.constant 0 : index
    %c96_180 = arith.constant 96 : index
    %257 = vector.load %arg2[%c0_179, %c96_180] : memref<16x128xbf16, #tpu.memory_space<vmem>>, vector<16x16xbf16>
    %258 = arith.extf %257 : vector<16x16xbf16> to vector<16x16xf32>
    %c0_181 = arith.constant 0 : index
    %c96_182 = arith.constant 96 : index
    %259 = vector.load %arg3[%c0_181, %c96_182] : memref<16x128xbf16, #tpu.memory_space<vmem>>, vector<16x16xbf16>
    %260 = arith.extf %259 : vector<16x16xbf16> to vector<16x16xf32>
    %c0_183 = arith.constant 0 : index
    %c96_184 = arith.constant 96 : index
    %261 = vector.load %arg4[%c0_183, %c96_184] : memref<16x128xbf16, #tpu.memory_space<vmem>>, vector<16x16xbf16>
    %262 = arith.extf %261 : vector<16x16xbf16> to vector<16x16xf32>
    %263 = arith.mulf %236, %248 : vector<16x16xf32>
    %264 = arith.mulf %240, %250 : vector<16x16xf32>
    %265 = arith.addf %263, %264 : vector<16x16xf32>
    %cst_185 = arith.constant dense<0.000000e+00> : vector<16xf32>
    %266 = vector.multi_reduction <add>, %265, %cst_185 [1] : vector<16x16xf32> to vector<16xf32>
    %267 = vector.shape_cast %266 : vector<16xf32> to vector<16x1xf32>
    %c0_186 = arith.constant 0 : index
    %c6_187 = arith.constant 6 : index
    %268 = vector.load %arg15[%c0_186, %c6_187] : memref<16x8xf32, #tpu.memory_space<vmem>>, vector<16x1xf32>
    tpu.vector_store %arg15[%c0_186, %c6_187], %267 {strides = array<i32>} : memref<16x8xf32, #tpu.memory_space<vmem>>, vector<16x1xf32>,
    %269 = arith.mulf %236, %252 : vector<16x16xf32>
    %270 = arith.mulf %240, %254 : vector<16x16xf32>
    %271 = arith.addf %269, %270 : vector<16x16xf32>
    %cst_188 = arith.constant dense<0.000000e+00> : vector<16xf32>
    %272 = vector.multi_reduction <add>, %271, %cst_188 [1] : vector<16x16xf32> to vector<16xf32>
    %273 = vector.shape_cast %272 : vector<16xf32> to vector<16x1xf32>
    %c0_189 = arith.constant 0 : index
    %c7 = arith.constant 7 : index
    %274 = vector.load %arg14[%c0_189, %c7] : memref<16x9xf32, #tpu.memory_space<vmem>>, vector<16x1xf32>
    tpu.vector_store %arg14[%c0_189, %c7], %273 {strides = array<i32>} : memref<16x9xf32, #tpu.memory_space<vmem>>, vector<16x1xf32>,
    %275 = arith.mulf %236, %256 : vector<16x16xf32>
    %276 = arith.mulf %236, %260 : vector<16x16xf32>
    %277 = arith.addf %258, %262 : vector<16x16xf32>
    %278 = arith.mulf %240, %277 : vector<16x16xf32>
    %279 = arith.addf %276, %278 : vector<16x16xf32>
    %cst_190 = arith.constant dense<0.000000e+00> : vector<16xf32>
    %280 = vector.multi_reduction <add>, %275, %cst_190 [1] : vector<16x16xf32> to vector<16xf32>
    %281 = vector.shape_cast %280 : vector<16xf32> to vector<16x1xf32>
    %c0_191 = arith.constant 0 : index
    %c7_192 = arith.constant 7 : index
    %282 = vector.load %arg12[%c0_191, %c7_192] : memref<16x9xf32, #tpu.memory_space<vmem>>, vector<16x1xf32>
    tpu.vector_store %arg12[%c0_191, %c7_192], %281 {strides = array<i32>} : memref<16x9xf32, #tpu.memory_space<vmem>>, vector<16x1xf32>,
    %cst_193 = arith.constant dense<0.000000e+00> : vector<16xf32>
    %283 = vector.multi_reduction <add>, %279, %cst_193 [1] : vector<16x16xf32> to vector<16xf32>
    %284 = vector.shape_cast %283 : vector<16xf32> to vector<16x1xf32>
    %c0_194 = arith.constant 0 : index
    %c7_195 = arith.constant 7 : index
    %285 = vector.load %arg13[%c0_194, %c7_195] : memref<16x9xf32, #tpu.memory_space<vmem>>, vector<16x1xf32>
    tpu.vector_store %arg13[%c0_194, %c7_195], %284 {strides = array<i32>} : memref<16x9xf32, #tpu.memory_space<vmem>>, vector<16x1xf32>,
    %c0_196 = arith.constant 0 : index
    %c112 = arith.constant 112 : index
    %286 = vector.load %arg7[%c0_196, %c112] : memref<16x128xbf16, #tpu.memory_space<vmem>>, vector<16x16xbf16>
    %287 = arith.extf %286 : vector<16x16xbf16> to vector<16x16xf32>
    %c0_197 = arith.constant 0 : index
    %c112_198 = arith.constant 112 : index
    %288 = vector.load %arg8[%c0_197, %c112_198] : memref<16x128xbf16, #tpu.memory_space<vmem>>, vector<16x16xbf16>
    %289 = arith.extf %288 : vector<16x16xbf16> to vector<16x16xf32>
    %c0_199 = arith.constant 0 : index
    %c112_200 = arith.constant 112 : index
    %290 = vector.load %arg5[%c0_199, %c112_200] : memref<16x128xbf16, #tpu.memory_space<vmem>>, vector<16x16xbf16>
    %291 = arith.extf %290 : vector<16x16xbf16> to vector<16x16xf32>
    %c0_201 = arith.constant 0 : index
    %c112_202 = arith.constant 112 : index
    %292 = vector.load %arg6[%c0_201, %c112_202] : memref<16x128xbf16, #tpu.memory_space<vmem>>, vector<16x16xbf16>
    %293 = arith.extf %292 : vector<16x16xbf16> to vector<16x16xf32>
    %c0_203 = arith.constant 0 : index
    %c112_204 = arith.constant 112 : index
    %294 = vector.load %arg1[%c0_203, %c112_204] : memref<16x128xbf16, #tpu.memory_space<vmem>>, vector<16x16xbf16>
    %295 = arith.extf %294 : vector<16x16xbf16> to vector<16x16xf32>
    %c0_205 = arith.constant 0 : index
    %c112_206 = arith.constant 112 : index
    %296 = vector.load %arg2[%c0_205, %c112_206] : memref<16x128xbf16, #tpu.memory_space<vmem>>, vector<16x16xbf16>
    %297 = arith.extf %296 : vector<16x16xbf16> to vector<16x16xf32>
    %c0_207 = arith.constant 0 : index
    %c112_208 = arith.constant 112 : index
    %298 = vector.load %arg3[%c0_207, %c112_208] : memref<16x128xbf16, #tpu.memory_space<vmem>>, vector<16x16xbf16>
    %299 = arith.extf %298 : vector<16x16xbf16> to vector<16x16xf32>
    %c0_209 = arith.constant 0 : index
    %c112_210 = arith.constant 112 : index
    %300 = vector.load %arg4[%c0_209, %c112_210] : memref<16x128xbf16, #tpu.memory_space<vmem>>, vector<16x16xbf16>
    %301 = arith.extf %300 : vector<16x16xbf16> to vector<16x16xf32>
    %302 = arith.mulf %275, %287 : vector<16x16xf32>
    %303 = arith.mulf %279, %289 : vector<16x16xf32>
    %304 = arith.addf %302, %303 : vector<16x16xf32>
    %cst_211 = arith.constant dense<0.000000e+00> : vector<16xf32>
    %305 = vector.multi_reduction <add>, %304, %cst_211 [1] : vector<16x16xf32> to vector<16xf32>
    %306 = vector.shape_cast %305 : vector<16xf32> to vector<16x1xf32>
    %c0_212 = arith.constant 0 : index
    %c7_213 = arith.constant 7 : index
    %307 = vector.load %arg15[%c0_212, %c7_213] : memref<16x8xf32, #tpu.memory_space<vmem>>, vector<16x1xf32>
    tpu.vector_store %arg15[%c0_212, %c7_213], %306 {strides = array<i32>} : memref<16x8xf32, #tpu.memory_space<vmem>>, vector<16x1xf32>,
    %308 = arith.mulf %275, %291 : vector<16x16xf32>
    %309 = arith.mulf %279, %293 : vector<16x16xf32>
    %310 = arith.addf %308, %309 : vector<16x16xf32>
    %cst_214 = arith.constant dense<0.000000e+00> : vector<16xf32>
    %311 = vector.multi_reduction <add>, %310, %cst_214 [1] : vector<16x16xf32> to vector<16xf32>
    %312 = vector.shape_cast %311 : vector<16xf32> to vector<16x1xf32>
    %c0_215 = arith.constant 0 : index
    %c8 = arith.constant 8 : index
    %313 = vector.load %arg14[%c0_215, %c8] : memref<16x9xf32, #tpu.memory_space<vmem>>, vector<16x1xf32>
    tpu.vector_store %arg14[%c0_215, %c8], %312 {strides = array<i32>} : memref<16x9xf32, #tpu.memory_space<vmem>>, vector<16x1xf32>,
    %314 = arith.mulf %275, %295 : vector<16x16xf32>
    %315 = arith.mulf %275, %299 : vector<16x16xf32>
    %316 = arith.addf %297, %301 : vector<16x16xf32>
    %317 = arith.mulf %279, %316 : vector<16x16xf32>
    %318 = arith.addf %315, %317 : vector<16x16xf32>
    %cst_216 = arith.constant dense<0.000000e+00> : vector<16xf32>
    %319 = vector.multi_reduction <add>, %314, %cst_216 [1] : vector<16x16xf32> to vector<16xf32>
    %320 = vector.shape_cast %319 : vector<16xf32> to vector<16x1xf32>
    %c0_217 = arith.constant 0 : index
    %c8_218 = arith.constant 8 : index
    %321 = vector.load %arg12[%c0_217, %c8_218] : memref<16x9xf32, #tpu.memory_space<vmem>>, vector<16x1xf32>
    tpu.vector_store %arg12[%c0_217, %c8_218], %320 {strides = array<i32>} : memref<16x9xf32, #tpu.memory_space<vmem>>, vector<16x1xf32>,
    %cst_219 = arith.constant dense<0.000000e+00> : vector<16xf32>
    %322 = vector.multi_reduction <add>, %318, %cst_219 [1] : vector<16x16xf32> to vector<16xf32>
    %323 = vector.shape_cast %322 : vector<16xf32> to vector<16x1xf32>
    %c0_220 = arith.constant 0 : index
    %c8_221 = arith.constant 8 : index
    %324 = vector.load %arg13[%c0_220, %c8_221] : memref<16x9xf32, #tpu.memory_space<vmem>>, vector<16x1xf32>
    tpu.vector_store %arg13[%c0_220, %c8_221], %323 {strides = array<i32>} : memref<16x9xf32, #tpu.memory_space<vmem>>, vector<16x1xf32>,
    return
  }
  func.func @transform_0(%arg0: i32) -> (i32, i32) {
    %c0_i32 = arith.constant 0 : i32
    %c0_i32_0 = arith.constant 0 : i32
    return %arg0, %c0_i32 : i32, i32
  }
  func.func @transform_1(%arg0: i32) -> (i32, i32) {
    %c0_i32 = arith.constant 0 : i32
    %c0_i32_0 = arith.constant 0 : i32
    return %arg0, %c0_i32 : i32, i32
  }
  func.func @transform_2(%arg0: i32) -> (i32, i32) {
    %c0_i32 = arith.constant 0 : i32
    %c0_i32_0 = arith.constant 0 : i32
    return %arg0, %c0_i32 : i32, i32
  }
  func.func @transform_3(%arg0: i32) -> (i32, i32) {
    %c0_i32 = arith.constant 0 : i32
    %c0_i32_0 = arith.constant 0 : i32
    return %arg0, %c0_i32 : i32, i32
  }
  func.func @transform_4(%arg0: i32) -> (i32, i32) {
    %c0_i32 = arith.constant 0 : i32
    %c0_i32_0 = arith.constant 0 : i32
    return %arg0, %c0_i32 : i32, i32
  }
  func.func @transform_5(%arg0: i32) -> (i32, i32) {
    %c0_i32 = arith.constant 0 : i32
    %c0_i32_0 = arith.constant 0 : i32
    return %arg0, %c0_i32 : i32, i32
  }
  func.func @transform_6(%arg0: i32) -> (i32, i32) {
    %c0_i32 = arith.constant 0 : i32
    %c0_i32_0 = arith.constant 0 : i32
    return %arg0, %c0_i32 : i32, i32
  }
  func.func @transform_7(%arg0: i32) -> (i32, i32) {
    %c0_i32 = arith.constant 0 : i32
    %c0_i32_0 = arith.constant 0 : i32
    return %arg0, %c0_i32 : i32, i32
  }
  func.func @transform_8(%arg0: i32) -> (i32, i32) {
    %c0_i32 = arith.constant 0 : i32
    %c0_i32_0 = arith.constant 0 : i32
    return %arg0, %c0_i32 : i32, i32
  }
  func.func @transform_9(%arg0: i32) -> (i32, i32) {
    %c0_i32 = arith.constant 0 : i32
    %c0_i32_0 = arith.constant 0 : i32
    return %arg0, %c0_i32 : i32, i32
  }
  func.func @transform_10(%arg0: i32) -> (i32, i32) {
    %c0_i32 = arith.constant 0 : i32
    %c0_i32_0 = arith.constant 0 : i32
    return %arg0, %c0_i32 : i32, i32
  }
  func.func @transform_11(%arg0: i32) -> (i32, i32) {
    %c0_i32 = arith.constant 0 : i32
    %c0_i32_0 = arith.constant 0 : i32
    return %arg0, %c0_i32 : i32, i32
  }
  func.func @transform_12(%arg0: i32) -> (i32, i32) {
    %c0_i32 = arith.constant 0 : i32
    %c0_i32_0 = arith.constant 0 : i32
    return %arg0, %c0_i32 : i32, i32
  }
  func.func @transform_13(%arg0: i32) -> (i32, i32) {
    %c0_i32 = arith.constant 0 : i32
    %c0_i32_0 = arith.constant 0 : i32
    return %arg0, %c0_i32 : i32, i32
  }
  func.func @transform_14(%arg0: i32) -> (i32, i32) {
    %c0_i32 = arith.constant 0 : i32
    %c0_i32_0 = arith.constant 0 : i32
    return %arg0, %c0_i32 : i32, i32
  }
}

</mosaic_0001>

<llo_original>
// kernel: tpu_custom_call.1
$region0: #{tpu_custom_call.1}
  #allocation0 [shape = 'u32[]', space=smem, size = 0x4, offset = 0x4, fixed_abs, tag = 'smem constant byte address 0x4 - core index']
  #allocation1 [shape = 'u32[144,128]{1,0:T(1,128)}', space=vmem, size = 0x12000, scoped, tag = 'internal scratch']
  %s0 = inlined_call_operand.vmem [shape: bf16[32,128], index: 0, kind: input, shape index: {}]
  %s1 = inlined_call_operand.vmem [shape: bf16[32,128], index: 1, kind: input, shape index: {}]
  %s2 = inlined_call_operand.vmem [shape: bf16[32,128], index: 2, kind: input, shape index: {}]
  %s3 = inlined_call_operand.vmem [shape: bf16[32,128], index: 3, kind: input, shape index: {}]
  %s4 = inlined_call_operand.vmem [shape: bf16[32,128], index: 4, kind: input, shape index: {}]
  %s5 = inlined_call_operand.vmem [shape: bf16[32,128], index: 5, kind: input, shape index: {}]
  %s6 = inlined_call_operand.vmem [shape: bf16[32,128], index: 6, kind: input, shape index: {}]
  %s7 = inlined_call_operand.vmem [shape: bf16[32,128], index: 7, kind: input, shape index: {}]
  %s8 = inlined_call_operand.vmem [shape: f32[32,16], index: 8, kind: input, shape index: {}]
  %s9 = inlined_call_operand.vmem [shape: f32[32,16], index: 9, kind: input, shape index: {}]
  %s10 = inlined_call_operand.vmem [shape: f32[32,16], index: 10, kind: input, shape index: {}]
  %s11 = inlined_call_operand.vmem [shape: f32[32,9], index: 11, kind: output, shape index: {0}]
  %s12 = inlined_call_operand.vmem [shape: f32[32,9], index: 12, kind: output, shape index: {1}]
  %s13 = inlined_call_operand.vmem [shape: f32[32,9], index: 13, kind: output, shape index: {2}]
  %s14 = inlined_call_operand.vmem [shape: f32[32,8], index: 14, kind: output, shape index: {3}]
  %15 = xla_tuple %s11, %s12, %s13, %s14
  %s16 = sld [smem:[#allocation0]]
  $region101: #{tpu_custom_call.1} parent=0
    _
  %s18 = ssub.s32 1, %s16
  %s19 = scalar_select 0, %s18, %s16
  loop: start=0, step=1, limit=4
  $region2: #{tpu_custom_call.1} parent=0 // loop_pre_header
    _
  $region3: #{tpu_custom_call.1} parent=0 // loop_header
    %s21 = sphi 0, %s25
    %p22 = scmp.ge.s32.totalorder %s21, 4
    %s31 = sphi 0, %s33
    %s34 = sphi 0, %s31
    %s35 = sphi 0, %s34
    %s51 = sphi 0, %s35
    %s57 = sphi 0, %s59
    %s60 = sphi 0, %s57
    %s61 = sphi 0, %s60
    %s77 = sphi 0, %s61
    %s83 = sphi 0, %s85
    %s86 = sphi 0, %s83
    %s87 = sphi 0, %s86
    %s103 = sphi 0, %s87
    %s109 = sphi 0, %s111
    %s112 = sphi 0, %s109
    %s113 = sphi 0, %s112
    %s129 = sphi 0, %s113
    %s135 = sphi 0, %s137
    %s138 = sphi 0, %s135
    %s139 = sphi 0, %s138
    %s155 = sphi 0, %s139
    %s161 = sphi 0, %s163
    %s164 = sphi 0, %s161
    %s165 = sphi 0, %s164
    %s181 = sphi 0, %s165
    %s187 = sphi 0, %s189
    %s190 = sphi 0, %s187
    %s191 = sphi 0, %s190
    %s207 = sphi 0, %s191
    %s213 = sphi 0, %s215
    %s216 = sphi 0, %s213
    %s217 = sphi 0, %s216
    %s233 = sphi 0, %s217
    %s239 = sphi 0, %s241
    %s242 = sphi 0, %s239
    %s243 = sphi 0, %s242
    %s259 = sphi 0, %s243
    %s265 = sphi 0, %s267
    %s268 = sphi 0, %s265
    %s269 = sphi 0, %s268
    %s285 = sphi 0, %s269
    %s291 = sphi 0, %s293
    %s294 = sphi 0, %s291
    %s295 = sphi 0, %s294
    %s311 = sphi 0, %s295
    %s317 = sphi 0, %s319
    %s320 = sphi 0, %s317
    %s321 = sphi 0, %s320
    %s337 = sphi 0, %s321
    %s343 = sphi 0, %s345
    %s346 = sphi 0, %s343
    %s347 = sphi 0, %s346
    %s363 = sphi 0, %s347
    %s369 = sphi 0, %s371
    %s372 = sphi 0, %s369
    %s373 = sphi 0, %s372
    %s389 = sphi 0, %s373
    %s395 = sphi 0, %s397
    %s398 = sphi 0, %s395
    %s399 = sphi 0, %s398
    %s415 = sphi 0, %s399
  $region4: #{tpu_custom_call.1} parent=0 // loop_header_branch
    %24 = sbr.rel (%p22) target = $region8
  $region5: #{tpu_custom_call.1} parent=0 // loop_body
    %s26 = ssub.s32 %s21, 1
    %s27 = ssub.s32 %s21, 2
    %s28 = sadd.s32 %s21, 1
    %s29 = ssub.s32 %s21, %s28
    %p30 = scmp.eq.s32.totalorder %s29, 0
    %s32 = sadd.s32 %s31, 1
    %s33 = scalar_select %p30, %s31, %s32
    %p36 = pneg %p30
    %p37 = scmp.eq.s32.totalorder %s21, 1
    %p38 = por %p36, %p37
    %p39 = scmp.ne.s32.totalorder %s31, %s34
    %p40 = scmp.eq.s32.totalorder %s21, 0
    %p41 = por %p39, %p40
    %p42 = scmp.ne.s32.totalorder %s31, %s34
    %p43 = scmp.eq.s32.totalorder %s26, 1
    %p44 = por %p42, %p43
    %p45 = scmp.ne.s32.totalorder %s34, %s35
    %p46 = scmp.eq.s32.totalorder %s26, 0
    %p47 = por %p45, %p46
    %p48 = scmp.ne.s32.totalorder %s34, %s35
    %p49 = scmp.eq.s32.totalorder %s27, 1
    %p50 = por %p48, %p49
    %p52 = scmp.ne.s32.totalorder %s35, %s51
    %p53 = scmp.eq.s32.totalorder %s27, 0
    %p54 = por %p52, %p53
    %s55 = ssub.s32 %s21, %s28
    %p56 = scmp.eq.s32.totalorder %s55, 0
    %s58 = sadd.s32 %s57, 1
    %s59 = scalar_select %p56, %s57, %s58
    %p62 = pneg %p56
    %p63 = scmp.eq.s32.totalorder %s21, 1
    %p64 = por %p62, %p63
    %p65 = scmp.ne.s32.totalorder %s57, %s60
    %p66 = scmp.eq.s32.totalorder %s21, 0
    %p67 = por %p65, %p66
    %p68 = scmp.ne.s32.totalorder %s57, %s60
    %p69 = scmp.eq.s32.totalorder %s26, 1
    %p70 = por %p68, %p69
    %p71 = scmp.ne.s32.totalorder %s60, %s61
    %p72 = scmp.eq.s32.totalorder %s26, 0
    %p73 = por %p71, %p72
    %p74 = scmp.ne.s32.totalorder %s60, %s61
    %p75 = scmp.eq.s32.totalorder %s27, 1
    %p76 = por %p74, %p75
    %p78 = scmp.ne.s32.totalorder %s61, %s77
    %p79 = scmp.eq.s32.totalorder %s27, 0
    %p80 = por %p78, %p79
    %s81 = ssub.s32 %s21, %s28
    %p82 = scmp.eq.s32.totalorder %s81, 0
    %s84 = sadd.s32 %s83, 1
    %s85 = scalar_select %p82, %s83, %s84
    %p88 = pneg %p82
    %p89 = scmp.eq.s32.totalorder %s21, 1
    %p90 = por %p88, %p89
    %p91 = scmp.ne.s32.totalorder %s83, %s86
    %p92 = scmp.eq.s32.totalorder %s21, 0
    %p93 = por %p91, %p92
    %p94 = scmp.ne.s32.totalorder %s83, %s86
    %p95 = scmp.eq.s32.totalorder %s26, 1
    %p96 = por %p94, %p95
    %p97 = scmp.ne.s32.totalorder %s86, %s87
    %p98 = scmp.eq.s32.totalorder %s26, 0
    %p99 = por %p97, %p98
    %p100 = scmp.ne.s32.totalorder %s86, %s87
    %p101 = scmp.eq.s32.totalorder %s27, 1
    %p102 = por %p100, %p101
    %p104 = scmp.ne.s32.totalorder %s87, %s103
    %p105 = scmp.eq.s32.totalorder %s27, 0
    %p106 = por %p104, %p105
    %s107 = ssub.s32 %s21, %s28
    %p108 = scmp.eq.s32.totalorder %s107, 0
    %s110 = sadd.s32 %s109, 1
    %s111 = scalar_select %p108, %s109, %s110
    %p114 = pneg %p108
    %p115 = scmp.eq.s32.totalorder %s21, 1
    %p116 = por %p114, %p115
    %p117 = scmp.ne.s32.totalorder %s109, %s112
    %p118 = scmp.eq.s32.totalorder %s21, 0
    %p119 = por %p117, %p118
    %p120 = scmp.ne.s32.totalorder %s109, %s112
    %p121 = scmp.eq.s32.totalorder %s26, 1
    %p122 = por %p120, %p121
    %p123 = scmp.ne.s32.totalorder %s112, %s113
    %p124 = scmp.eq.s32.totalorder %s26, 0
    %p125 = por %p123, %p124
    %p126 = scmp.ne.s32.totalorder %s112, %s113
    %p127 = scmp.eq.s32.totalorder %s27, 1
    %p128 = por %p126, %p127
    %p130 = scmp.ne.s32.totalorder %s113, %s129
    %p131 = scmp.eq.s32.totalorder %s27, 0
    %p132 = por %p130, %p131
    %s133 = ssub.s32 %s21, %s28
    %p134 = scmp.eq.s32.totalorder %s133, 0
    %s136 = sadd.s32 %s135, 1
    %s137 = scalar_select %p134, %s135, %s136
    %p140 = pneg %p134
    %p141 = scmp.eq.s32.totalorder %s21, 1
    %p142 = por %p140, %p141
    %p143 = scmp.ne.s32.totalorder %s135, %s138
    %p144 = scmp.eq.s32.totalorder %s21, 0
    %p145 = por %p143, %p144
    %p146 = scmp.ne.s32.totalorder %s135, %s138
    %p147 = scmp.eq.s32.totalorder %s26, 1
    %p148 = por %p146, %p147
    %p149 = scmp.ne.s32.totalorder %s138, %s139
    %p150 = scmp.eq.s32.totalorder %s26, 0
    %p151 = por %p149, %p150
    %p152 = scmp.ne.s32.totalorder %s138, %s139
    %p153 = scmp.eq.s32.totalorder %s27, 1
    %p154 = por %p152, %p153
    %p156 = scmp.ne.s32.totalorder %s139, %s155
    %p157 = scmp.eq.s32.totalorder %s27, 0
    %p158 = por %p156, %p157
    %s159 = ssub.s32 %s21, %s28
    %p160 = scmp.eq.s32.totalorder %s159, 0
    %s162 = sadd.s32 %s161, 1
    %s163 = scalar_select %p160, %s161, %s162
    %p166 = pneg %p160
    %p167 = scmp.eq.s32.totalorder %s21, 1
    %p168 = por %p166, %p167
    %p169 = scmp.ne.s32.totalorder %s161, %s164
    %p170 = scmp.eq.s32.totalorder %s21, 0
    %p171 = por %p169, %p170
    %p172 = scmp.ne.s32.totalorder %s161, %s164
    %p173 = scmp.eq.s32.totalorder %s26, 1
    %p174 = por %p172, %p173
    %p175 = scmp.ne.s32.totalorder %s164, %s165
    %p176 = scmp.eq.s32.totalorder %s26, 0
    %p177 = por %p175, %p176
    %p178 = scmp.ne.s32.totalorder %s164, %s165
    %p179 = scmp.eq.s32.totalorder %s27, 1
    %p180 = por %p178, %p179
    %p182 = scmp.ne.s32.totalorder %s165, %s181
    %p183 = scmp.eq.s32.totalorder %s27, 0
    %p184 = por %p182, %p183
    %s185 = ssub.s32 %s21, %s28
    %p186 = scmp.eq.s32.totalorder %s185, 0
    %s188 = sadd.s32 %s187, 1
    %s189 = scalar_select %p186, %s187, %s188
    %p192 = pneg %p186
    %p193 = scmp.eq.s32.totalorder %s21, 1
    %p194 = por %p192, %p193
    %p195 = scmp.ne.s32.totalorder %s187, %s190
    %p196 = scmp.eq.s32.totalorder %s21, 0
    %p197 = por %p195, %p196
    %p198 = scmp.ne.s32.totalorder %s187, %s190
    %p199 = scmp.eq.s32.totalorder %s26, 1
    %p200 = por %p198, %p199
    %p201 = scmp.ne.s32.totalorder %s190, %s191
    %p202 = scmp.eq.s32.totalorder %s26, 0
    %p203 = por %p201, %p202
    %p204 = scmp.ne.s32.totalorder %s190, %s191
    %p205 = scmp.eq.s32.totalorder %s27, 1
    %p206 = por %p204, %p205
    %p208 = scmp.ne.s32.totalorder %s191, %s207
    %p209 = scmp.eq.s32.totalorder %s27, 0
    %p210 = por %p208, %p209
    %s211 = ssub.s32 %s21, %s28
    %p212 = scmp.eq.s32.totalorder %s211, 0
    %s214 = sadd.s32 %s213, 1
    %s215 = scalar_select %p212, %s213, %s214
    %p218 = pneg %p212
    %p219 = scmp.eq.s32.totalorder %s21, 1
    %p220 = por %p218, %p219
    %p221 = scmp.ne.s32.totalorder %s213, %s216
    %p222 = scmp.eq.s32.totalorder %s21, 0
    %p223 = por %p221, %p222
    %p224 = scmp.ne.s32.totalorder %s213, %s216
    %p225 = scmp.eq.s32.totalorder %s26, 1
    %p226 = por %p224, %p225
    %p227 = scmp.ne.s32.totalorder %s216, %s217
    %p228 = scmp.eq.s32.totalorder %s26, 0
    %p229 = por %p227, %p228
    %p230 = scmp.ne.s32.totalorder %s216, %s217
    %p231 = scmp.eq.s32.totalorder %s27, 1
    %p232 = por %p230, %p231
    %p234 = scmp.ne.s32.totalorder %s217, %s233
    %p235 = scmp.eq.s32.totalorder %s27, 0
    %p236 = por %p234, %p235
    %s237 = ssub.s32 %s21, %s28
    %p238 = scmp.eq.s32.totalorder %s237, 0
    %s240 = sadd.s32 %s239, 1
    %s241 = scalar_select %p238, %s239, %s240
    %p244 = pneg %p238
    %p245 = scmp.eq.s32.totalorder %s21, 1
    %p246 = por %p244, %p245
    %p247 = scmp.ne.s32.totalorder %s239, %s242
    %p248 = scmp.eq.s32.totalorder %s21, 0
    %p249 = por %p247, %p248
    %p250 = scmp.ne.s32.totalorder %s239, %s242
    %p251 = scmp.eq.s32.totalorder %s26, 1
    %p252 = por %p250, %p251
    %p253 = scmp.ne.s32.totalorder %s242, %s243
    %p254 = scmp.eq.s32.totalorder %s26, 0
    %p255 = por %p253, %p254
    %p256 = scmp.ne.s32.totalorder %s242, %s243
    %p257 = scmp.eq.s32.totalorder %s27, 1
    %p258 = por %p256, %p257
    %p260 = scmp.ne.s32.totalorder %s243, %s259
    %p261 = scmp.eq.s32.totalorder %s27, 0
    %p262 = por %p260, %p261
    %s263 = ssub.s32 %s21, %s28
    %p264 = scmp.eq.s32.totalorder %s263, 0
    %s266 = sadd.s32 %s265, 1
    %s267 = scalar_select %p264, %s265, %s266
    %p270 = pneg %p264
    %p271 = scmp.eq.s32.totalorder %s21, 1
    %p272 = por %p270, %p271
    %p273 = scmp.ne.s32.totalorder %s265, %s268
    %p274 = scmp.eq.s32.totalorder %s21, 0
    %p275 = por %p273, %p274
    %p276 = scmp.ne.s32.totalorder %s265, %s268
    %p277 = scmp.eq.s32.totalorder %s26, 1
    %p278 = por %p276, %p277
    %p279 = scmp.ne.s32.totalorder %s268, %s269
    %p280 = scmp.eq.s32.totalorder %s26, 0
    %p281 = por %p279, %p280
    %p282 = scmp.ne.s32.totalorder %s268, %s269
    %p283 = scmp.eq.s32.totalorder %s27, 1
    %p284 = por %p282, %p283
    %p286 = scmp.ne.s32.totalorder %s269, %s285
    %p287 = scmp.eq.s32.totalorder %s27, 0
    %p288 = por %p286, %p287
    %s289 = ssub.s32 %s21, %s28
    %p290 = scmp.eq.s32.totalorder %s289, 0
    %s292 = sadd.s32 %s291, 1
    %s293 = scalar_select %p290, %s291, %s292
    %p296 = pneg %p290
    %p297 = scmp.eq.s32.totalorder %s21, 1
    %p298 = por %p296, %p297
    %p299 = scmp.ne.s32.totalorder %s291, %s294
    %p300 = scmp.eq.s32.totalorder %s21, 0
    %p301 = por %p299, %p300
    %p302 = scmp.ne.s32.totalorder %s291, %s294
    %p303 = scmp.eq.s32.totalorder %s26, 1
    %p304 = por %p302, %p303
    %p305 = scmp.ne.s32.totalorder %s294, %s295
    %p306 = scmp.eq.s32.totalorder %s26, 0
    %p307 = por %p305, %p306
    %p308 = scmp.ne.s32.totalorder %s294, %s295
    %p309 = scmp.eq.s32.totalorder %s27, 1
    %p310 = por %p308, %p309
    %p312 = scmp.ne.s32.totalorder %s295, %s311
    %p313 = scmp.eq.s32.totalorder %s27, 0
    %p314 = por %p312, %p313
    %s315 = ssub.s32 %s21, %s28
    %p316 = scmp.eq.s32.totalorder %s315, 0
    %s318 = sadd.s32 %s317, 1
    %s319 = scalar_select %p316, %s317, %s318
    %p322 = pneg %p316
    %p323 = scmp.eq.s32.totalorder %s21, 1
    %p324 = por %p322, %p323
    %p325 = scmp.ne.s32.totalorder %s317, %s320
    %p326 = scmp.eq.s32.totalorder %s21, 0
    %p327 = por %p325, %p326
    %p328 = scmp.ne.s32.totalorder %s317, %s320
    %p329 = scmp.eq.s32.totalorder %s26, 1
    %p330 = por %p328, %p329
    %p331 = scmp.ne.s32.totalorder %s320, %s321
    %p332 = scmp.eq.s32.totalorder %s26, 0
    %p333 = por %p331, %p332
    %p334 = scmp.ne.s32.totalorder %s320, %s321
    %p335 = scmp.eq.s32.totalorder %s27, 1
    %p336 = por %p334, %p335
    %p338 = scmp.ne.s32.totalorder %s321, %s337
    %p339 = scmp.eq.s32.totalorder %s27, 0
    %p340 = por %p338, %p339
    %s341 = ssub.s32 %s21, %s28
    %p342 = scmp.eq.s32.totalorder %s341, 0
    %s344 = sadd.s32 %s343, 1
    %s345 = scalar_select %p342, %s343, %s344
    %p348 = pneg %p342
    %p349 = scmp.eq.s32.totalorder %s21, 1
    %p350 = por %p348, %p349
    %p351 = scmp.ne.s32.totalorder %s343, %s346
    %p352 = scmp.eq.s32.totalorder %s21, 0
    %p353 = por %p351, %p352
    %p354 = scmp.ne.s32.totalorder %s343, %s346
    %p355 = scmp.eq.s32.totalorder %s26, 1
    %p356 = por %p354, %p355
    %p357 = scmp.ne.s32.totalorder %s346, %s347
    %p358 = scmp.eq.s32.totalorder %s26, 0
    %p359 = por %p357, %p358
    %p360 = scmp.ne.s32.totalorder %s346, %s347
    %p361 = scmp.eq.s32.totalorder %s27, 1
    %p362 = por %p360, %p361
    %p364 = scmp.ne.s32.totalorder %s347, %s363
    %p365 = scmp.eq.s32.totalorder %s27, 0
    %p366 = por %p364, %p365
    %s367 = ssub.s32 %s21, %s28
    %p368 = scmp.eq.s32.totalorder %s367, 0
    %s370 = sadd.s32 %s369, 1
    %s371 = scalar_select %p368, %s369, %s370
    %p374 = pneg %p368
    %p375 = scmp.eq.s32.totalorder %s21, 1
    %p376 = por %p374, %p375
    %p377 = scmp.ne.s32.totalorder %s369, %s372
    %p378 = scmp.eq.s32.totalorder %s21, 0
    %p379 = por %p377, %p378
    %p380 = scmp.ne.s32.totalorder %s369, %s372
    %p381 = scmp.eq.s32.totalorder %s26, 1
    %p382 = por %p380, %p381
    %p383 = scmp.ne.s32.totalorder %s372, %s373
    %p384 = scmp.eq.s32.totalorder %s26, 0
    %p385 = por %p383, %p384
    %p386 = scmp.ne.s32.totalorder %s372, %s373
    %p387 = scmp.eq.s32.totalorder %s27, 1
    %p388 = por %p386, %p387
    %p390 = scmp.ne.s32.totalorder %s373, %s389
    %p391 = scmp.eq.s32.totalorder %s27, 0
    %p392 = por %p390, %p391
    %s393 = ssub.s32 %s21, %s28
    %p394 = scmp.eq.s32.totalorder %s393, 0
    %s396 = sadd.s32 %s395, 1
    %s397 = scalar_select %p394, %s395, %s396
    %p400 = pneg %p394
    %p401 = scmp.eq.s32.totalorder %s21, 1
    %p402 = por %p400, %p401
    %p403 = scmp.ne.s32.totalorder %s395, %s398
    %p404 = scmp.eq.s32.totalorder %s21, 0
    %p405 = por %p403, %p404
    %p406 = scmp.ne.s32.totalorder %s395, %s398
    %p407 = scmp.eq.s32.totalorder %s26, 1
    %p408 = por %p406, %p407
    %p409 = scmp.ne.s32.totalorder %s398, %s399
    %p410 = scmp.eq.s32.totalorder %s26, 0
    %p411 = por %p409, %p410
    %p412 = scmp.ne.s32.totalorder %s398, %s399
    %p413 = scmp.eq.s32.totalorder %s27, 1
    %p414 = por %p412, %p413
    %p416 = scmp.ne.s32.totalorder %s399, %s415
    %p417 = scmp.eq.s32.totalorder %s27, 0
    %p418 = por %p416, %p417
    %p419 = scmp.le.s32.totalorder 1, %s21
    %p420 = scmp.lt.s32.totalorder %s21, 3
    %p421 = pnand %p419, %p420
    %p422 = pneg %p421
    // Predicated region
    $region9: #{tpu_custom_call.1} parent=5 // pred_check
      _
    $region10: #{tpu_custom_call.1} parent=5 // pred_check_branch
      %424 = sbr.rel (%p421) target = $region12
    $region11: #{tpu_custom_call.1} parent=5 // pred_region
      %s425 = ssub.s32 %s21, 1
    $region12: #{tpu_custom_call.1} parent=5 // pred_fallthru
      _
    %p426 = scmp.lt.s32.totalorder %s21, 2
    // Predicated region
    $region13: #{tpu_custom_call.1} parent=5 // pred_check
      %p427 = pneg %p426
    $region14: #{tpu_custom_call.1} parent=5 // pred_check_branch
      %429 = sbr.rel (%p427) target = $region16
    $region15: #{tpu_custom_call.1} parent=5 // pred_region
      // Predicated region
      $region17: #{tpu_custom_call.1} parent=15 // pred_check
        %p430 = pneg %p41
      $region18: #{tpu_custom_call.1} parent=15 // pred_check_branch
        %432 = sbr.rel (%p430) target = $region20
      $region19: #{tpu_custom_call.1} parent=15 // pred_region
        %s433 = smul.u32 2, %s21
        %p434 = scmp.lt.s32.totalorder %s433, 3
        %s435 = scalar_select %p434, %s433, 3
        %s436 = smul.addr %s435, 4
        %s437 = scalar_lea.vmem %s0, %s436
        %s438 = smul.u32 2, %s21
      $region20: #{tpu_custom_call.1} parent=15 // pred_fallthru
        _
      // Predicated region
      $region21: #{tpu_custom_call.1} parent=15 // pred_check
        %p439 = pneg %p67
      $region22: #{tpu_custom_call.1} parent=15 // pred_check_branch
        %441 = sbr.rel (%p439) target = $region24
      $region23: #{tpu_custom_call.1} parent=15 // pred_region
        %s442 = smul.u32 2, %s21
        %p443 = scmp.lt.s32.totalorder %s442, 3
        %s444 = scalar_select %p443, %s442, 3
        %s445 = smul.addr %s444, 4
        %s446 = scalar_lea.vmem %s1, %s445
        %s447 = smul.u32 2, %s21
      $region24: #{tpu_custom_call.1} parent=15 // pred_fallthru
        _
      // Predicated region
      $region25: #{tpu_custom_call.1} parent=15 // pred_check
        %p448 = pneg %p93
      $region26: #{tpu_custom_call.1} parent=15 // pred_check_branch
        %450 = sbr.rel (%p448) target = $region28
      $region27: #{tpu_custom_call.1} parent=15 // pred_region
        %s451 = smul.u32 2, %s21
        %p452 = scmp.lt.s32.totalorder %s451, 3
        %s453 = scalar_select %p452, %s451, 3
        %s454 = smul.addr %s453, 4
        %s455 = scalar_lea.vmem %s2, %s454
        %s456 = smul.u32 2, %s21
      $region28: #{tpu_custom_call.1} parent=15 // pred_fallthru
        _
      // Predicated region
      $region29: #{tpu_custom_call.1} parent=15 // pred_check
        %p457 = pneg %p119
      $region30: #{tpu_custom_call.1} parent=15 // pred_check_branch
        %459 = sbr.rel (%p457) target = $region32
      $region31: #{tpu_custom_call.1} parent=15 // pred_region
        %s460 = smul.u32 2, %s21
        %p461 = scmp.lt.s32.totalorder %s460, 3
        %s462 = scalar_select %p461, %s460, 3
        %s463 = smul.addr %s462, 4
        %s464 = scalar_lea.vmem %s3, %s463
        %s465 = smul.u32 2, %s21
      $region32: #{tpu_custom_call.1} parent=15 // pred_fallthru
        _
      // Predicated region
      $region33: #{tpu_custom_call.1} parent=15 // pred_check
        %p466 = pneg %p145
      $region34: #{tpu_custom_call.1} parent=15 // pred_check_branch
        %468 = sbr.rel (%p466) target = $region36
      $region35: #{tpu_custom_call.1} parent=15 // pred_region
        %s469 = smul.u32 2, %s21
        %p470 = scmp.lt.s32.totalorder %s469, 3
        %s471 = scalar_select %p470, %s469, 3
        %s472 = smul.addr %s471, 4
        %s473 = scalar_lea.vmem %s4, %s472
        %s474 = smul.u32 2, %s21
      $region36: #{tpu_custom_call.1} parent=15 // pred_fallthru
        _
      // Predicated region
      $region37: #{tpu_custom_call.1} parent=15 // pred_check
        %p475 = pneg %p171
      $region38: #{tpu_custom_call.1} parent=15 // pred_check_branch
        %477 = sbr.rel (%p475) target = $region40
      $region39: #{tpu_custom_call.1} parent=15 // pred_region
        %s478 = smul.u32 2, %s21
        %p479 = scmp.lt.s32.totalorder %s478, 3
        %s480 = scalar_select %p479, %s478, 3
        %s481 = smul.addr %s480, 4
        %s482 = scalar_lea.vmem %s5, %s481
        %s483 = smul.u32 2, %s21
      $region40: #{tpu_custom_call.1} parent=15 // pred_fallthru
        _
      // Predicated region
      $region41: #{tpu_custom_call.1} parent=15 // pred_check
        %p484 = pneg %p197
      $region42: #{tpu_custom_call.1} parent=15 // pred_check_branch
        %486 = sbr.rel (%p484) target = $region44
      $region43: #{tpu_custom_call.1} parent=15 // pred_region
        %s487 = smul.u32 2, %s21
        %p488 = scmp.lt.s32.totalorder %s487, 3
        %s489 = scalar_select %p488, %s487, 3
        %s490 = smul.addr %s489, 4
        %s491 = scalar_lea.vmem %s6, %s490
        %s492 = smul.u32 2, %s21
      $region44: #{tpu_custom_call.1} parent=15 // pred_fallthru
        _
      // Predicated region
      $region45: #{tpu_custom_call.1} parent=15 // pred_check
        %p493 = pneg %p223
      $region46: #{tpu_custom_call.1} parent=15 // pred_check_branch
        %495 = sbr.rel (%p493) target = $region48
      $region47: #{tpu_custom_call.1} parent=15 // pred_region
        %s496 = smul.u32 2, %s21
        %p497 = scmp.lt.s32.totalorder %s496, 3
        %s498 = scalar_select %p497, %s496, 3
        %s499 = smul.addr %s498, 4
        %s500 = scalar_lea.vmem %s7, %s499
        %s501 = smul.u32 2, %s21
      $region48: #{tpu_custom_call.1} parent=15 // pred_fallthru
        _
      // Predicated region
      $region49: #{tpu_custom_call.1} parent=15 // pred_check
        %p502 = pneg %p249
      $region50: #{tpu_custom_call.1} parent=15 // pred_check_branch
        %504 = sbr.rel (%p502) target = $region52
      $region51: #{tpu_custom_call.1} parent=15 // pred_region
        %s505 = smul.u32 2, %s21
        %p506 = scmp.lt.s32.totalorder %s505, 3
        %s507 = scalar_select %p506, %s505, 3
        %s508 = smul.addr %s507, 8
        %s509 = scalar_lea.vmem %s8, %s508
        %s510 = smul.u32 2, %s21
      $region52: #{tpu_custom_call.1} parent=15 // pred_fallthru
        _
      // Predicated region
      $region53: #{tpu_custom_call.1} parent=15 // pred_check
        %p511 = pneg %p275
      $region54: #{tpu_custom_call.1} parent=15 // pred_check_branch
        %513 = sbr.rel (%p511) target = $region56
      $region55: #{tpu_custom_call.1} parent=15 // pred_region
        %s514 = smul.u32 2, %s21
        %p515 = scmp.lt.s32.totalorder %s514, 3
        %s516 = scalar_select %p515, %s514, 3
        %s517 = smul.addr %s516, 8
        %s518 = scalar_lea.vmem %s9, %s517
        %s519 = smul.u32 2, %s21
      $region56: #{tpu_custom_call.1} parent=15 // pred_fallthru
        _
      // Predicated region
      $region57: #{tpu_custom_call.1} parent=15 // pred_check
        %p520 = pneg %p301
      $region58: #{tpu_custom_call.1} parent=15 // pred_check_branch
        %522 = sbr.rel (%p520) target = $region60
      $region59: #{tpu_custom_call.1} parent=15 // pred_region
        %s523 = smul.u32 2, %s21
        %p524 = scmp.lt.s32.totalorder %s523, 3
        %s525 = scalar_select %p524, %s523, 3
        %s526 = smul.addr %s525, 8
        %s527 = scalar_lea.vmem %s10, %s526
        %s528 = smul.u32 2, %s21
      $region60: #{tpu_custom_call.1} parent=15 // pred_fallthru
        _
    $region16: #{tpu_custom_call.1} parent=5 // pred_fallthru
      _
    %p529 = scmp.le.s32.totalorder 1, %s21
    %p530 = scmp.lt.s32.totalorder %s21, 3
    %p531 = pnand %p529, %p530
    %p532 = pneg %p531
    // Predicated region
    $region61: #{tpu_custom_call.1} parent=5 // pred_check
      _
    $region62: #{tpu_custom_call.1} parent=5 // pred_check_branch
      %534 = sbr.rel (%p531) target = $region64
    $region63: #{tpu_custom_call.1} parent=5 // pred_region
      %s535 = ssub.s32 %s21, 1
      %s536 = smul.u32 2, %s26
      %p537 = scmp.lt.s32.totalorder %s536, 3
      %s538 = scalar_select %p537, %s536, 3
      %s539 = smul.addr %s538, 4
      %s540 = scalar_lea.vmem %s0, %s539
      %p541 = pneg %p47
      %p542 = pneg %p44
      %s543 = smul.u32 2, %s26
      %p544 = scmp.lt.s32.totalorder %s543, 3
      %s545 = scalar_select %p544, %s543, 3
      %s546 = smul.addr %s545, 4
      %s547 = scalar_lea.vmem %s1, %s546
      %p548 = pneg %p73
      %p549 = pneg %p70
      %s550 = smul.u32 2, %s26
      %p551 = scmp.lt.s32.totalorder %s550, 3
      %s552 = scalar_select %p551, %s550, 3
      %s553 = smul.addr %s552, 4
      %s554 = scalar_lea.vmem %s2, %s553
      %p555 = pneg %p99
      %p556 = pneg %p96
      %s557 = smul.u32 2, %s26
      %p558 = scmp.lt.s32.totalorder %s557, 3
      %s559 = scalar_select %p558, %s557, 3
      %s560 = smul.addr %s559, 4
      %s561 = scalar_lea.vmem %s3, %s560
      %p562 = pneg %p125
      %p563 = pneg %p122
      %s564 = smul.u32 2, %s26
      %p565 = scmp.lt.s32.totalorder %s564, 3
      %s566 = scalar_select %p565, %s564, 3
      %s567 = smul.addr %s566, 4
      %s568 = scalar_lea.vmem %s4, %s567
      %p569 = pneg %p151
      %p570 = pneg %p148
      %s571 = smul.u32 2, %s26
      %p572 = scmp.lt.s32.totalorder %s571, 3
      %s573 = scalar_select %p572, %s571, 3
      %s574 = smul.addr %s573, 4
      %s575 = scalar_lea.vmem %s5, %s574
      %p576 = pneg %p177
      %p577 = pneg %p174
      %s578 = smul.u32 2, %s26
      %p579 = scmp.lt.s32.totalorder %s578, 3
      %s580 = scalar_select %p579, %s578, 3
      %s581 = smul.addr %s580, 4
      %s582 = scalar_lea.vmem %s6, %s581
      %p583 = pneg %p203
      %p584 = pneg %p200
      %s585 = smul.u32 2, %s26
      %p586 = scmp.lt.s32.totalorder %s585, 3
      %s587 = scalar_select %p586, %s585, 3
      %s588 = smul.addr %s587, 4
      %s589 = scalar_lea.vmem %s7, %s588
      %p590 = pneg %p229
      %p591 = pneg %p226
      %s592 = smul.u32 2, %s26
      %p593 = scmp.lt.s32.totalorder %s592, 3
      %s594 = scalar_select %p593, %s592, 3
      %s595 = smul.addr %s594, 8
      %s596 = scalar_lea.vmem %s8, %s595
      %p597 = pneg %p255
      %p598 = pneg %p252
      %s599 = smul.u32 2, %s26
      %p600 = scmp.lt.s32.totalorder %s599, 3
      %s601 = scalar_select %p600, %s599, 3
      %s602 = smul.addr %s601, 8
      %s603 = scalar_lea.vmem %s9, %s602
      %p604 = pneg %p281
      %p605 = pneg %p278
      %s606 = smul.u32 2, %s26
      %p607 = scmp.lt.s32.totalorder %s606, 3
      %s608 = scalar_select %p607, %s606, 3
      %s609 = smul.addr %s608, 8
      %s610 = scalar_lea.vmem %s10, %s609
      %p611 = pneg %p307
      %p612 = pneg %p304
      %p613 = pneg %p333
      %p614 = pneg %p330
      %s615 = smul.u32 2, %s26
      %p616 = scmp.lt.s32.totalorder %s615, 3
      %s617 = scalar_select %p616, %s615, 3
      %s618 = smul.addr %s617, 8
      %s619 = scalar_lea.vmem %s11, %s618
      %p620 = pneg %p359
      %p621 = pneg %p356
      %s622 = smul.u32 2, %s26
      %p623 = scmp.lt.s32.totalorder %s622, 3
      %s624 = scalar_select %p623, %s622, 3
      %s625 = smul.addr %s624, 8
      %s626 = scalar_lea.vmem %s12, %s625
      %p627 = pneg %p385
      %p628 = pneg %p382
      %s629 = smul.u32 2, %s26
      %p630 = scmp.lt.s32.totalorder %s629, 3
      %s631 = scalar_select %p630, %s629, 3
      %s632 = smul.addr %s631, 8
      %s633 = scalar_lea.vmem %s13, %s632
      %p634 = pneg %p411
      %p635 = pneg %p408
      %s636 = smul.u32 2, %s26
      %p637 = scmp.lt.s32.totalorder %s636, 3
      %s638 = scalar_select %p637, %s636, 3
      %s639 = smul.addr %s638, 8
      %s640 = scalar_lea.vmem %s14, %s639
      %s641 = smul.u32 2, %s26
      %p642 = scmp.lt.s32.totalorder %s641, 3
      %s643 = scalar_select %p642, %s641, 3
      %s644 = smul.addr %s643, 4
      %s645 = scalar_lea.vmem %s0, %s644
      %s646 = smul.u32 2, %s26
      %s647 = smul.u32 2, %s26
      %p648 = scmp.lt.s32.totalorder %s647, 3
      %s649 = scalar_select %p648, %s647, 3
      %s650 = smul.addr %s649, 4
      %s651 = scalar_lea.vmem %s1, %s650
      %s652 = smul.u32 2, %s26
      %s653 = smul.u32 2, %s26
      %p654 = scmp.lt.s32.totalorder %s653, 3
      %s655 = scalar_select %p654, %s653, 3
      %s656 = smul.addr %s655, 4
      %s657 = scalar_lea.vmem %s2, %s656
      %s658 = smul.u32 2, %s26
      %s659 = smul.u32 2, %s26
      %p660 = scmp.lt.s32.totalorder %s659, 3
      %s661 = scalar_select %p660, %s659, 3
      %s662 = smul.addr %s661, 4
      %s663 = scalar_lea.vmem %s3, %s662
      %s664 = smul.u32 2, %s26
      %s665 = smul.u32 2, %s26
      %p666 = scmp.lt.s32.totalorder %s665, 3
      %s667 = scalar_select %p666, %s665, 3
      %s668 = smul.addr %s667, 4
      %s669 = scalar_lea.vmem %s4, %s668
      %s670 = smul.u32 2, %s26
      %s671 = smul.u32 2, %s26
      %p672 = scmp.lt.s32.totalorder %s671, 3
      %s673 = scalar_select %p672, %s671, 3
      %s674 = smul.addr %s673, 4
      %s675 = scalar_lea.vmem %s5, %s674
      %s676 = smul.u32 2, %s26
      %s677 = smul.u32 2, %s26
      %p678 = scmp.lt.s32.totalorder %s677, 3
      %s679 = scalar_select %p678, %s677, 3
      %s680 = smul.addr %s679, 4
      %s681 = scalar_lea.vmem %s6, %s680
      %s682 = smul.u32 2, %s26
      %s683 = smul.u32 2, %s26
      %p684 = scmp.lt.s32.totalorder %s683, 3
      %s685 = scalar_select %p684, %s683, 3
      %s686 = smul.addr %s685, 4
      %s687 = scalar_lea.vmem %s7, %s686
      %s688 = smul.u32 2, %s26
      %s689 = smul.u32 2, %s26
      %p690 = scmp.lt.s32.totalorder %s689, 3
      %s691 = scalar_select %p690, %s689, 3
      %s692 = smul.addr %s691, 8
      %s693 = scalar_lea.vmem %s8, %s692
      %s694 = smul.u32 2, %s26
      %s695 = smul.u32 2, %s26
      %p696 = scmp.lt.s32.totalorder %s695, 3
      %s697 = scalar_select %p696, %s695, 3
      %s698 = smul.addr %s697, 8
      %s699 = scalar_lea.vmem %s9, %s698
      %s700 = smul.u32 2, %s26
      %s701 = smul.u32 2, %s26
      %p702 = scmp.lt.s32.totalorder %s701, 3
      %s703 = scalar_select %p702, %s701, 3
      %s704 = smul.addr %s703, 8
      %s705 = scalar_lea.vmem %s10, %s704
      %s706 = smul.u32 2, %s26
      %s707 = smul.u32 2, %s26
      %p708 = scmp.lt.s32.totalorder %s707, 3
      %s709 = scalar_select %p708, %s707, 3
      %s710 = smul.addr %s709, 8
      %s711 = scalar_lea.vmem %s11, %s710
      %s712 = smul.u32 2, %s26
      %s713 = smul.u32 2, %s26
      %p714 = scmp.lt.s32.totalorder %s713, 3
      %s715 = scalar_select %p714, %s713, 3
      %s716 = smul.addr %s715, 8
      %s717 = scalar_lea.vmem %s12, %s716
      %s718 = smul.u32 2, %s26
      %s719 = smul.u32 2, %s26
      %p720 = scmp.lt.s32.totalorder %s719, 3
      %s721 = scalar_select %p720, %s719, 3
      %s722 = smul.addr %s721, 8
      %s723 = scalar_lea.vmem %s13, %s722
      %s724 = smul.u32 2, %s26
      %s725 = smul.u32 2, %s26
      %p726 = scmp.lt.s32.totalorder %s725, 3
      %s727 = scalar_select %p726, %s725, 3
      %s728 = smul.addr %s727, 8
      %s729 = scalar_lea.vmem %s14, %s728
      %s730 = smul.u32 2, %s26
      %v731 = vld [vmem:[%s699] sm:$0xff]
      %v732 = vld [vmem:[%s699 + $0x8] sm:$0xff]
      %v733 = vld [vmem:[%s705] sm:$0xff]
      %v734 = vld [vmem:[%s705 + $0x8] sm:$0xff]
      %vm735 = vcmask 130048
      %v736 = vsel %vm735, %v731, 0.0
      %737 = vadd.xlane.f32.xlu0 %v736
      %v738 = vpop.xlane.xlu0 %737
      %v739 = vsel %vm735, %v732, 0.0
      %740 = vadd.xlane.f32.xlu0 %v739
      %v741 = vpop.xlane.xlu0 %740
      %vm742 = vcmask 7168
      %743 = vst.msk [vmem:[%s711] sm:$0xff] %vm742, %v738
      %744 = vst.msk [vmem:[%s711 + $0x8] sm:$0xff] %vm742, %v741
      %v745 = vsel %vm735, %v733, 0.0
      %746 = vadd.xlane.f32.xlu0 %v745
      %v747 = vpop.xlane.xlu0 %746
      %v748 = vsel %vm735, %v734, 0.0
      %749 = vadd.xlane.f32.xlu0 %v748
      %v750 = vpop.xlane.xlu0 %749
      %751 = vst.msk [vmem:[%s717] sm:$0xff] %vm742, %v747
      %752 = vst.msk [vmem:[%s717 + $0x8] sm:$0xff] %vm742, %v750
      %v753 = vld [vmem:[%s693] sm:$0xff]
      %v754 = vld [vmem:[%s693 + $0x8] sm:$0xff]
      %v755 = vmul.f32 %v731, %v753
      %v756 = vmul.f32 %v732, %v754
      %v757 = vsel %vm735, %v755, 0.0
      %758 = vadd.xlane.f32.xlu0 %v757
      %v759 = vpop.xlane.xlu0 %758
      %v760 = vsel %vm735, %v756, 0.0
      %761 = vadd.xlane.f32.xlu0 %v760
      %v762 = vpop.xlane.xlu0 %761
      %763 = vst.msk [vmem:[%s723] sm:$0xff] %vm742, %v759
      %764 = vst.msk [vmem:[%s723 + $0x8] sm:$0xff] %vm742, %v762
      %v765 = vld [vmem:[%s681] sm:$0xf]
      %v766 = vld [vmem:[%s681 + $0x4] sm:$0xf]
      %v767 = vunpack.c.l.bf16 %v765
      %v768 = vunpack.c.l.bf16 %v766
      %v769 = vld [vmem:[%s687] sm:$0xf]
      %v770 = vld [vmem:[%s687 + $0x4] sm:$0xf]
      %v771 = vunpack.c.l.bf16 %v769
      %v772 = vunpack.c.l.bf16 %v770
      %v773 = vld [vmem:[%s669] sm:$0xf]
      %v774 = vld [vmem:[%s669 + $0x4] sm:$0xf]
      %v775 = vunpack.c.l.bf16 %v773
      %v776 = vunpack.c.l.bf16 %v774
      %v777 = vld [vmem:[%s675] sm:$0xf]
      %v778 = vld [vmem:[%s675 + $0x4] sm:$0xf]
      %v779 = vunpack.c.l.bf16 %v777
      %v780 = vunpack.c.l.bf16 %v778
      %v781 = vld [vmem:[%s645] sm:$0xf]
      %v782 = vld [vmem:[%s645 + $0x4] sm:$0xf]
      %v783 = vunpack.c.l.bf16 %v781
      %v784 = vunpack.c.l.bf16 %v782
      %v785 = vld [vmem:[%s651] sm:$0xf]
      %v786 = vld [vmem:[%s651 + $0x4] sm:$0xf]
      %v787 = vunpack.c.l.bf16 %v785
      %v788 = vunpack.c.l.bf16 %v786
      %v789 = vld [vmem:[%s657] sm:$0xf]
      %v790 = vld [vmem:[%s657 + $0x4] sm:$0xf]
      %v791 = vunpack.c.l.bf16 %v789
      %v792 = vunpack.c.l.bf16 %v790
      %v793 = vld [vmem:[%s663] sm:$0xf]
      %v794 = vld [vmem:[%s663 + $0x4] sm:$0xf]
      %v795 = vunpack.c.l.bf16 %v793
      %v796 = vunpack.c.l.bf16 %v794
      %v797 = vmul.f32 %v731, %v767
      %v798 = vmul.f32 %v732, %v768
      %v799 = vmul.f32 %v733, %v771
      %v800 = vmul.f32 %v734, %v772
      %v801 = vadd.f32 %v797, %v799
      %v802 = vadd.f32 %v798, %v800
      %v803 = vsel %vm735, %v801, 0.0
      %804 = vadd.xlane.f32.xlu0 %v803
      %v805 = vpop.xlane.xlu0 %804
      %v806 = vsel %vm735, %v802, 0.0
      %807 = vadd.xlane.f32.xlu0 %v806
      %v808 = vpop.xlane.xlu0 %807
      %809 = vst.msk [vmem:[%s729] sm:$0xff] %vm742, %v805
      %810 = vst.msk [vmem:[%s729 + $0x8] sm:$0xff] %vm742, %v808
      %v811 = vmul.f32 %v731, %v775
      %v812 = vmul.f32 %v732, %v776
      %v813 = vmul.f32 %v733, %v779
      %v814 = vmul.f32 %v734, %v780
      %v815 = vadd.f32 %v811, %v813
      %v816 = vadd.f32 %v812, %v814
      %v817 = vsel %vm735, %v815, 0.0
      %818 = vadd.xlane.f32.xlu0 %v817
      %v819 = vpop.xlane.xlu0 %818
      %v820 = vsel %vm735, %v816, 0.0
      %821 = vadd.xlane.f32.xlu0 %v820
      %v822 = vpop.xlane.xlu0 %821
      %vm823 = vcmask 15368
      %824 = vst.msk [vmem:[%s723] sm:$0xff] %vm823, %v819
      %825 = vst.msk [vmem:[%s723 + $0x8] sm:$0xff] %vm823, %v822
      %v826 = vmul.f32 %v731, %v783
      %v827 = vmul.f32 %v732, %v784
      %v828 = vmul.f32 %v731, %v791
      %v829 = vmul.f32 %v732, %v792
      %v830 = vadd.f32 %v787, %v795
      %v831 = vadd.f32 %v788, %v796
      %v832 = vmul.f32 %v733, %v830
      %v833 = vmul.f32 %v734, %v831
      %v834 = vadd.f32 %v828, %v832
      %v835 = vadd.f32 %v829, %v833
      %v836 = vsel %vm735, %v826, 0.0
      %837 = vadd.xlane.f32.xlu0 %v836
      %v838 = vpop.xlane.xlu0 %837
      %v839 = vsel %vm735, %v827, 0.0
      %840 = vadd.xlane.f32.xlu0 %v839
      %v841 = vpop.xlane.xlu0 %840
      %842 = vst.msk [vmem:[%s711] sm:$0xff] %vm823, %v838
      %843 = vst.msk [vmem:[%s711 + $0x8] sm:$0xff] %vm823, %v841
      %v844 = vsel %vm735, %v834, 0.0
      %845 = vadd.xlane.f32.xlu0 %v844
      %v846 = vpop.xlane.xlu0 %845
      %v847 = vsel %vm735, %v835, 0.0
      %848 = vadd.xlane.f32.xlu0 %v847
      %v849 = vpop.xlane.xlu0 %848
      %850 = vst.msk [vmem:[%s717] sm:$0xff] %vm823, %v846
      %851 = vst.msk [vmem:[%s717 + $0x8] sm:$0xff] %vm823, %v849
      %v852 = vld [vmem:[%s681] sm:$0xf]
      %v853 = vld [vmem:[%s681 + $0x4] sm:$0xf]
      %v854 = vunpack.c.l.bf16 %v852
      %v855 = vunpack.c.l.bf16 %v853
      %v856 = vld [vmem:[%s687] sm:$0xf]
      %v857 = vld [vmem:[%s687 + $0x4] sm:$0xf]
      %v858 = vunpack.c.l.bf16 %v856
      %v859 = vunpack.c.l.bf16 %v857
      %v860 = vld [vmem:[%s669] sm:$0xf]
      %v861 = vld [vmem:[%s669 + $0x4] sm:$0xf]
      %v862 = vunpack.c.l.bf16 %v860
      %v863 = vunpack.c.l.bf16 %v861
      %v864 = vld [vmem:[%s675] sm:$0xf]
      %v865 = vld [vmem:[%s675 + $0x4] sm:$0xf]
      %v866 = vunpack.c.l.bf16 %v864
      %v867 = vunpack.c.l.bf16 %v865
      %v868 = vld [vmem:[%s645] sm:$0xf]
      %v869 = vld [vmem:[%s645 + $0x4] sm:$0xf]
      %v870 = vunpack.c.l.bf16 %v868
      %v871 = vunpack.c.l.bf16 %v869
      %v872 = vld [vmem:[%s651] sm:$0xf]
      %v873 = vld [vmem:[%s651 + $0x4] sm:$0xf]
      %v874 = vunpack.c.l.bf16 %v872
      %v875 = vunpack.c.l.bf16 %v873
      %v876 = vld [vmem:[%s657] sm:$0xf]
      %v877 = vld [vmem:[%s657 + $0x4] sm:$0xf]
      %v878 = vunpack.c.l.bf16 %v876
      %v879 = vunpack.c.l.bf16 %v877
      %v880 = vld [vmem:[%s663] sm:$0xf]
      %v881 = vld [vmem:[%s663 + $0x4] sm:$0xf]
      %v882 = vunpack.c.l.bf16 %v880
      %v883 = vunpack.c.l.bf16 %v881
      %886 = vrot.lane.b32.xlu0 %v854, 112
      %v887 = vpop.permute.xlu0 %886
      %888 = vrot.lane.b32.xlu0 %v855, 112
      %v889 = vpop.permute.xlu0 %888
      %v892 = vmul.f32 %v826, %v887
      %v893 = vmul.f32 %v827, %v889
      %896 = vrot.lane.b32.xlu0 %v858, 112
      %v897 = vpop.permute.xlu0 %896
      %898 = vrot.lane.b32.xlu0 %v859, 112
      %v899 = vpop.permute.xlu0 %898
      %v902 = vmul.f32 %v834, %v897
      %v903 = vmul.f32 %v835, %v899
      %v904 = vadd.f32 %v892, %v902
      %v905 = vadd.f32 %v893, %v903
      %v906 = vsel %vm735, %v904, 0.0
      %907 = vadd.xlane.f32.xlu0 %v906
      %v908 = vpop.xlane.xlu0 %907
      %v909 = vsel %vm735, %v905, 0.0
      %910 = vadd.xlane.f32.xlu0 %v909
      %v911 = vpop.xlane.xlu0 %910
      %912 = vst.msk [vmem:[%s729] sm:$0xff] %vm823, %v908
      %913 = vst.msk [vmem:[%s729 + $0x8] sm:$0xff] %vm823, %v911
      %916 = vrot.lane.b32.xlu0 %v862, 112
      %v917 = vpop.permute.xlu0 %916
      %918 = vrot.lane.b32.xlu0 %v863, 112
      %v919 = vpop.permute.xlu0 %918
      %v922 = vmul.f32 %v826, %v917
      %v923 = vmul.f32 %v827, %v919
      %926 = vrot.lane.b32.xlu0 %v866, 112
      %v927 = vpop.permute.xlu0 %926
      %928 = vrot.lane.b32.xlu0 %v867, 112
      %v929 = vpop.permute.xlu0 %928
      %v932 = vmul.f32 %v834, %v927
      %v933 = vmul.f32 %v835, %v929
      %v934 = vadd.f32 %v922, %v932
      %v935 = vadd.f32 %v923, %v933
      %v936 = vsel %vm735, %v934, 0.0
      %937 = vadd.xlane.f32.xlu0 %v936
      %v938 = vpop.xlane.xlu0 %937
      %v939 = vsel %vm735, %v935, 0.0
      %940 = vadd.xlane.f32.xlu0 %v939
      %v941 = vpop.xlane.xlu0 %940
      %vm942 = vcmask 23568
      %943 = vst.msk [vmem:[%s723] sm:$0xff] %vm942, %v938
      %944 = vst.msk [vmem:[%s723 + $0x8] sm:$0xff] %vm942, %v941
      %947 = vrot.lane.b32.xlu0 %v870, 112
      %v948 = vpop.permute.xlu0 %947
      %949 = vrot.lane.b32.xlu0 %v871, 112
      %v950 = vpop.permute.xlu0 %949
      %v953 = vmul.f32 %v826, %v948
      %v954 = vmul.f32 %v827, %v950
      %957 = vrot.lane.b32.xlu0 %v878, 112
      %v958 = vpop.permute.xlu0 %957
      %959 = vrot.lane.b32.xlu0 %v879, 112
      %v960 = vpop.permute.xlu0 %959
      %v963 = vmul.f32 %v826, %v958
      %v964 = vmul.f32 %v827, %v960
      %v965 = vadd.f32 %v874, %v882
      %v966 = vadd.f32 %v875, %v883
      %969 = vrot.lane.b32.xlu0 %v965, 112
      %v970 = vpop.permute.xlu0 %969
      %971 = vrot.lane.b32.xlu0 %v966, 112
      %v972 = vpop.permute.xlu0 %971
      %v975 = vmul.f32 %v834, %v970
      %v976 = vmul.f32 %v835, %v972
      %v977 = vadd.f32 %v963, %v975
      %v978 = vadd.f32 %v964, %v976
      %v979 = vsel %vm735, %v953, 0.0
      %980 = vadd.xlane.f32.xlu0 %v979
      %v981 = vpop.xlane.xlu0 %980
      %v982 = vsel %vm735, %v954, 0.0
      %983 = vadd.xlane.f32.xlu0 %v982
      %v984 = vpop.xlane.xlu0 %983
      %985 = vst.msk [vmem:[%s711] sm:$0xff] %vm942, %v981
      %986 = vst.msk [vmem:[%s711 + $0x8] sm:$0xff] %vm942, %v984
      %v987 = vsel %vm735, %v977, 0.0
      %988 = vadd.xlane.f32.xlu0 %v987
      %v989 = vpop.xlane.xlu0 %988
      %v990 = vsel %vm735, %v978, 0.0
      %991 = vadd.xlane.f32.xlu0 %v990
      %v992 = vpop.xlane.xlu0 %991
      %993 = vst.msk [vmem:[%s717] sm:$0xff] %vm942, %v989
      %994 = vst.msk [vmem:[%s717 + $0x8] sm:$0xff] %vm942, %v992
      %v995 = vld [vmem:[%s681] sm:$0xf]
      %v996 = vld [vmem:[%s681 + $0x4] sm:$0xf]
      %v997 = vunpack.c.l.bf16 %v995
      %v998 = vunpack.c.l.bf16 %v996
      %v999 = vld [vmem:[%s687] sm:$0xf]
      %v1000 = vld [vmem:[%s687 + $0x4] sm:$0xf]
      %v1001 = vunpack.c.l.bf16 %v999
      %v1002 = vunpack.c.l.bf16 %v1000
      %v1003 = vld [vmem:[%s669] sm:$0xf]
      %v1004 = vld [vmem:[%s669 + $0x4] sm:$0xf]
      %v1005 = vunpack.c.l.bf16 %v1003
      %v1006 = vunpack.c.l.bf16 %v1004
      %v1007 = vld [vmem:[%s675] sm:$0xf]
      %v1008 = vld [vmem:[%s675 + $0x4] sm:$0xf]
      %v1009 = vunpack.c.l.bf16 %v1007
      %v1010 = vunpack.c.l.bf16 %v1008
      %v1011 = vld [vmem:[%s645] sm:$0xf]
      %v1012 = vld [vmem:[%s645 + $0x4] sm:$0xf]
      %v1013 = vunpack.c.l.bf16 %v1011
      %v1014 = vunpack.c.l.bf16 %v1012
      %v1015 = vld [vmem:[%s651] sm:$0xf]
      %v1016 = vld [vmem:[%s651 + $0x4] sm:$0xf]
      %v1017 = vunpack.c.l.bf16 %v1015
      %v1018 = vunpack.c.l.bf16 %v1016
      %v1019 = vld [vmem:[%s657] sm:$0xf]
      %v1020 = vld [vmem:[%s657 + $0x4] sm:$0xf]
      %v1021 = vunpack.c.l.bf16 %v1019
      %v1022 = vunpack.c.l.bf16 %v1020
      %v1023 = vld [vmem:[%s663] sm:$0xf]
      %v1024 = vld [vmem:[%s663 + $0x4] sm:$0xf]
      %v1025 = vunpack.c.l.bf16 %v1023
      %v1026 = vunpack.c.l.bf16 %v1024
      %1029 = vrot.lane.b32.xlu0 %v997, 96
      %v1030 = vpop.permute.xlu0 %1029
      %1031 = vrot.lane.b32.xlu0 %v998, 96
      %v1032 = vpop.permute.xlu0 %1031
      %v1035 = vmul.f32 %v953, %v1030
      %v1036 = vmul.f32 %v954, %v1032
      %1039 = vrot.lane.b32.xlu0 %v1001, 96
      %v1040 = vpop.permute.xlu0 %1039
      %1041 = vrot.lane.b32.xlu0 %v1002, 96
      %v1042 = vpop.permute.xlu0 %1041
      %v1045 = vmul.f32 %v977, %v1040
      %v1046 = vmul.f32 %v978, %v1042
      %v1047 = vadd.f32 %v1035, %v1045
      %v1048 = vadd.f32 %v1036, %v1046
      %v1049 = vsel %vm735, %v1047, 0.0
      %1050 = vadd.xlane.f32.xlu0 %v1049
      %v1051 = vpop.xlane.xlu0 %1050
      %v1052 = vsel %vm735, %v1048, 0.0
      %1053 = vadd.xlane.f32.xlu0 %v1052
      %v1054 = vpop.xlane.xlu0 %1053
      %1055 = vst.msk [vmem:[%s729] sm:$0xff] %vm942, %v1051
      %1056 = vst.msk [vmem:[%s729 + $0x8] sm:$0xff] %vm942, %v1054
      %1059 = vrot.lane.b32.xlu0 %v1005, 96
      %v1060 = vpop.permute.xlu0 %1059
      %1061 = vrot.lane.b32.xlu0 %v1006, 96
      %v1062 = vpop.permute.xlu0 %1061
      %v1065 = vmul.f32 %v953, %v1060
      %v1066 = vmul.f32 %v954, %v1062
      %1069 = vrot.lane.b32.xlu0 %v1009, 96
      %v1070 = vpop.permute.xlu0 %1069
      %1071 = vrot.lane.b32.xlu0 %v1010, 96
      %v1072 = vpop.permute.xlu0 %1071
      %v1075 = vmul.f32 %v977, %v1070
      %v1076 = vmul.f32 %v978, %v1072
      %v1077 = vadd.f32 %v1065, %v1075
      %v1078 = vadd.f32 %v1066, %v1076
      %v1079 = vsel %vm735, %v1077, 0.0
      %1080 = vadd.xlane.f32.xlu0 %v1079
      %v1081 = vpop.xlane.xlu0 %1080
      %v1082 = vsel %vm735, %v1078, 0.0
      %1083 = vadd.xlane.f32.xlu0 %v1082
      %v1084 = vpop.xlane.xlu0 %1083
      %vm1085 = vcmask 31768
      %1086 = vst.msk [vmem:[%s723] sm:$0xff] %vm1085, %v1081
      %1087 = vst.msk [vmem:[%s723 + $0x8] sm:$0xff] %vm1085, %v1084
      %1090 = vrot.lane.b32.xlu0 %v1013, 96
      %v1091 = vpop.permute.xlu0 %1090
      %1092 = vrot.lane.b32.xlu0 %v1014, 96
      %v1093 = vpop.permute.xlu0 %1092
      %v1096 = vmul.f32 %v953, %v1091
      %v1097 = vmul.f32 %v954, %v1093
      %1100 = vrot.lane.b32.xlu0 %v1021, 96
      %v1101 = vpop.permute.xlu0 %1100
      %1102 = vrot.lane.b32.xlu0 %v1022, 96
      %v1103 = vpop.permute.xlu0 %1102
      %v1106 = vmul.f32 %v953, %v1101
      %v1107 = vmul.f32 %v954, %v1103
      %v1108 = vadd.f32 %v1017, %v1025
      %v1109 = vadd.f32 %v1018, %v1026
      %1112 = vrot.lane.b32.xlu0 %v1108, 96
      %v1113 = vpop.permute.xlu0 %1112
      %1114 = vrot.lane.b32.xlu0 %v1109, 96
      %v1115 = vpop.permute.xlu0 %1114
      %v1118 = vmul.f32 %v977, %v1113
      %v1119 = vmul.f32 %v978, %v1115
      %v1120 = vadd.f32 %v1106, %v1118
      %v1121 = vadd.f32 %v1107, %v1119
      %v1122 = vsel %vm735, %v1096, 0.0
      %1123 = vadd.xlane.f32.xlu0 %v1122
      %v1124 = vpop.xlane.xlu0 %1123
      %v1125 = vsel %vm735, %v1097, 0.0
      %1126 = vadd.xlane.f32.xlu0 %v1125
      %v1127 = vpop.xlane.xlu0 %1126
      %1128 = vst.msk [vmem:[%s711] sm:$0xff] %vm1085, %v1124
      %1129 = vst.msk [vmem:[%s711 + $0x8] sm:$0xff] %vm1085, %v1127
      %v1130 = vsel %vm735, %v1120, 0.0
      %1131 = vadd.xlane.f32.xlu0 %v1130
      %v1132 = vpop.xlane.xlu0 %1131
      %v1133 = vsel %vm735, %v1121, 0.0
      %1134 = vadd.xlane.f32.xlu0 %v1133
      %v1135 = vpop.xlane.xlu0 %1134
      %1136 = vst.msk [vmem:[%s717] sm:$0xff] %vm1085, %v1132
      %1137 = vst.msk [vmem:[%s717 + $0x8] sm:$0xff] %vm1085, %v1135
      %v1138 = vld [vmem:[%s681] sm:$0xf]
      %v1139 = vld [vmem:[%s681 + $0x4] sm:$0xf]
      %v1140 = vunpack.c.l.bf16 %v1138
      %v1141 = vunpack.c.l.bf16 %v1139
      %v1142 = vld [vmem:[%s687] sm:$0xf]
      %v1143 = vld [vmem:[%s687 + $0x4] sm:$0xf]
      %v1144 = vunpack.c.l.bf16 %v1142
      %v1145 = vunpack.c.l.bf16 %v1143
      %v1146 = vld [vmem:[%s669] sm:$0xf]
      %v1147 = vld [vmem:[%s669 + $0x4] sm:$0xf]
      %v1148 = vunpack.c.l.bf16 %v1146
      %v1149 = vunpack.c.l.bf16 %v1147
      %v1150 = vld [vmem:[%s675] sm:$0xf]
      %v1151 = vld [vmem:[%s675 + $0x4] sm:$0xf]
      %v1152 = vunpack.c.l.bf16 %v1150
      %v1153 = vunpack.c.l.bf16 %v1151
      %v1154 = vld [vmem:[%s645] sm:$0xf]
      %v1155 = vld [vmem:[%s645 + $0x4] sm:$0xf]
      %v1156 = vunpack.c.l.bf16 %v1154
      %v1157 = vunpack.c.l.bf16 %v1155
      %v1158 = vld [vmem:[%s651] sm:$0xf]
      %v1159 = vld [vmem:[%s651 + $0x4] sm:$0xf]
      %v1160 = vunpack.c.l.bf16 %v1158
      %v1161 = vunpack.c.l.bf16 %v1159
      %v1162 = vld [vmem:[%s657] sm:$0xf]
      %v1163 = vld [vmem:[%s657 + $0x4] sm:$0xf]
      %v1164 = vunpack.c.l.bf16 %v1162
      %v1165 = vunpack.c.l.bf16 %v1163
      %v1166 = vld [vmem:[%s663] sm:$0xf]
      %v1167 = vld [vmem:[%s663 + $0x4] sm:$0xf]
      %v1168 = vunpack.c.l.bf16 %v1166
      %v1169 = vunpack.c.l.bf16 %v1167
      %1172 = vrot.lane.b32.xlu0 %v1140, 80
      %v1173 = vpop.permute.xlu0 %1172
      %1174 = vrot.lane.b32.xlu0 %v1141, 80
      %v1175 = vpop.permute.xlu0 %1174
      %v1178 = vmul.f32 %v1096, %v1173
      %v1179 = vmul.f32 %v1097, %v1175
      %1182 = vrot.lane.b32.xlu0 %v1144, 80
      %v1183 = vpop.permute.xlu0 %1182
      %1184 = vrot.lane.b32.xlu0 %v1145, 80
      %v1185 = vpop.permute.xlu0 %1184
      %v1188 = vmul.f32 %v1120, %v1183
      %v1189 = vmul.f32 %v1121, %v1185
      %v1190 = vadd.f32 %v1178, %v1188
      %v1191 = vadd.f32 %v1179, %v1189
      %v1192 = vsel %vm735, %v1190, 0.0
      %1193 = vadd.xlane.f32.xlu0 %v1192
      %v1194 = vpop.xlane.xlu0 %1193
      %v1195 = vsel %vm735, %v1191, 0.0
      %1196 = vadd.xlane.f32.xlu0 %v1195
      %v1197 = vpop.xlane.xlu0 %1196
      %1198 = vst.msk [vmem:[%s729] sm:$0xff] %vm1085, %v1194
      %1199 = vst.msk [vmem:[%s729 + $0x8] sm:$0xff] %vm1085, %v1197
      %1202 = vrot.lane.b32.xlu0 %v1148, 80
      %v1203 = vpop.permute.xlu0 %1202
      %1204 = vrot.lane.b32.xlu0 %v1149, 80
      %v1205 = vpop.permute.xlu0 %1204
      %v1208 = vmul.f32 %v1096, %v1203
      %v1209 = vmul.f32 %v1097, %v1205
      %1212 = vrot.lane.b32.xlu0 %v1152, 80
      %v1213 = vpop.permute.xlu0 %1212
      %1214 = vrot.lane.b32.xlu0 %v1153, 80
      %v1215 = vpop.permute.xlu0 %1214
      %v1218 = vmul.f32 %v1120, %v1213
      %v1219 = vmul.f32 %v1121, %v1215
      %v1220 = vadd.f32 %v1208, %v1218
      %v1221 = vadd.f32 %v1209, %v1219
      %v1222 = vsel %vm735, %v1220, 0.0
      %1223 = vadd.xlane.f32.xlu0 %v1222
      %v1224 = vpop.xlane.xlu0 %1223
      %v1225 = vsel %vm735, %v1221, 0.0
      %1226 = vadd.xlane.f32.xlu0 %v1225
      %v1227 = vpop.xlane.xlu0 %1226
      %vm1228 = vcmask 39968
      %1229 = vst.msk [vmem:[%s723] sm:$0xff] %vm1228, %v1224
      %1230 = vst.msk [vmem:[%s723 + $0x8] sm:$0xff] %vm1228, %v1227
      %1233 = vrot.lane.b32.xlu0 %v1156, 80
      %v1234 = vpop.permute.xlu0 %1233
      %1235 = vrot.lane.b32.xlu0 %v1157, 80
      %v1236 = vpop.permute.xlu0 %1235
      %v1239 = vmul.f32 %v1096, %v1234
      %v1240 = vmul.f32 %v1097, %v1236
      %1243 = vrot.lane.b32.xlu0 %v1164, 80
      %v1244 = vpop.permute.xlu0 %1243
      %1245 = vrot.lane.b32.xlu0 %v1165, 80
      %v1246 = vpop.permute.xlu0 %1245
      %v1249 = vmul.f32 %v1096, %v1244
      %v1250 = vmul.f32 %v1097, %v1246
      %v1251 = vadd.f32 %v1160, %v1168
      %v1252 = vadd.f32 %v1161, %v1169
      %1255 = vrot.lane.b32.xlu0 %v1251, 80
      %v1256 = vpop.permute.xlu0 %1255
      %1257 = vrot.lane.b32.xlu0 %v1252, 80
      %v1258 = vpop.permute.xlu0 %1257
      %v1261 = vmul.f32 %v1120, %v1256
      %v1262 = vmul.f32 %v1121, %v1258
      %v1263 = vadd.f32 %v1249, %v1261
      %v1264 = vadd.f32 %v1250, %v1262
      %v1265 = vsel %vm735, %v1239, 0.0
      %1266 = vadd.xlane.f32.xlu0 %v1265
      %v1267 = vpop.xlane.xlu0 %1266
      %v1268 = vsel %vm735, %v1240, 0.0
      %1269 = vadd.xlane.f32.xlu0 %v1268
      %v1270 = vpop.xlane.xlu0 %1269
      %1271 = vst.msk [vmem:[%s711] sm:$0xff] %vm1228, %v1267
      %1272 = vst.msk [vmem:[%s711 + $0x8] sm:$0xff] %vm1228, %v1270
      %v1273 = vsel %vm735, %v1263, 0.0
      %1274 = vadd.xlane.f32.xlu0 %v1273
      %v1275 = vpop.xlane.xlu0 %1274
      %v1276 = vsel %vm735, %v1264, 0.0
      %1277 = vadd.xlane.f32.xlu0 %v1276
      %v1278 = vpop.xlane.xlu0 %1277
      %1279 = vst.msk [vmem:[%s717] sm:$0xff] %vm1228, %v1275
      %1280 = vst.msk [vmem:[%s717 + $0x8] sm:$0xff] %vm1228, %v1278
      %v1281 = vld [vmem:[%s681] sm:$0xf]
      %v1282 = vld [vmem:[%s681 + $0x4] sm:$0xf]
      %v1283 = vunpack.c.l.bf16 %v1281
      %v1284 = vunpack.c.l.bf16 %v1282
      %v1285 = vld [vmem:[%s687] sm:$0xf]
      %v1286 = vld [vmem:[%s687 + $0x4] sm:$0xf]
      %v1287 = vunpack.c.l.bf16 %v1285
      %v1288 = vunpack.c.l.bf16 %v1286
      %v1289 = vld [vmem:[%s669] sm:$0xf]
      %v1290 = vld [vmem:[%s669 + $0x4] sm:$0xf]
      %v1291 = vunpack.c.l.bf16 %v1289
      %v1292 = vunpack.c.l.bf16 %v1290
      %v1293 = vld [vmem:[%s675] sm:$0xf]
      %v1294 = vld [vmem:[%s675 + $0x4] sm:$0xf]
      %v1295 = vunpack.c.l.bf16 %v1293
      %v1296 = vunpack.c.l.bf16 %v1294
      %v1297 = vld [vmem:[%s645] sm:$0xf]
      %v1298 = vld [vmem:[%s645 + $0x4] sm:$0xf]
      %v1299 = vunpack.c.l.bf16 %v1297
      %v1300 = vunpack.c.l.bf16 %v1298
      %v1301 = vld [vmem:[%s651] sm:$0xf]
      %v1302 = vld [vmem:[%s651 + $0x4] sm:$0xf]
      %v1303 = vunpack.c.l.bf16 %v1301
      %v1304 = vunpack.c.l.bf16 %v1302
      %v1305 = vld [vmem:[%s657] sm:$0xf]
      %v1306 = vld [vmem:[%s657 + $0x4] sm:$0xf]
      %v1307 = vunpack.c.l.bf16 %v1305
      %v1308 = vunpack.c.l.bf16 %v1306
      %v1309 = vld [vmem:[%s663] sm:$0xf]
      %v1310 = vld [vmem:[%s663 + $0x4] sm:$0xf]
      %v1311 = vunpack.c.l.bf16 %v1309
      %v1312 = vunpack.c.l.bf16 %v1310
      %1315 = vrot.lane.b32.xlu0 %v1283, 64
      %v1316 = vpop.permute.xlu0 %1315
      %1317 = vrot.lane.b32.xlu0 %v1284, 64
      %v1318 = vpop.permute.xlu0 %1317
      %v1321 = vmul.f32 %v1239, %v1316
      %v1322 = vmul.f32 %v1240, %v1318
      %1325 = vrot.lane.b32.xlu0 %v1287, 64
      %v1326 = vpop.permute.xlu0 %1325
      %1327 = vrot.lane.b32.xlu0 %v1288, 64
      %v1328 = vpop.permute.xlu0 %1327
      %v1331 = vmul.f32 %v1263, %v1326
      %v1332 = vmul.f32 %v1264, %v1328
      %v1333 = vadd.f32 %v1321, %v1331
      %v1334 = vadd.f32 %v1322, %v1332
      %v1335 = vsel %vm735, %v1333, 0.0
      %1336 = vadd.xlane.f32.xlu0 %v1335
      %v1337 = vpop.xlane.xlu0 %1336
      %v1338 = vsel %vm735, %v1334, 0.0
      %1339 = vadd.xlane.f32.xlu0 %v1338
      %v1340 = vpop.xlane.xlu0 %1339
      %1341 = vst.msk [vmem:[%s729] sm:$0xff] %vm1228, %v1337
      %1342 = vst.msk [vmem:[%s729 + $0x8] sm:$0xff] %vm1228, %v1340
      %1345 = vrot.lane.b32.xlu0 %v1291, 64
      %v1346 = vpop.permute.xlu0 %1345
      %1347 = vrot.lane.b32.xlu0 %v1292, 64
      %v1348 = vpop.permute.xlu0 %1347
      %v1351 = vmul.f32 %v1239, %v1346
      %v1352 = vmul.f32 %v1240, %v1348
      %1355 = vrot.lane.b32.xlu0 %v1295, 64
      %v1356 = vpop.permute.xlu0 %1355
      %1357 = vrot.lane.b32.xlu0 %v1296, 64
      %v1358 = vpop.permute.xlu0 %1357
      %v1361 = vmul.f32 %v1263, %v1356
      %v1362 = vmul.f32 %v1264, %v1358
      %v1363 = vadd.f32 %v1351, %v1361
      %v1364 = vadd.f32 %v1352, %v1362
      %v1365 = vsel %vm735, %v1363, 0.0
      %1366 = vadd.xlane.f32.xlu0 %v1365
      %v1367 = vpop.xlane.xlu0 %1366
      %v1368 = vsel %vm735, %v1364, 0.0
      %1369 = vadd.xlane.f32.xlu0 %v1368
      %v1370 = vpop.xlane.xlu0 %1369
      %vm1371 = vcmask 48168
      %1372 = vst.msk [vmem:[%s723] sm:$0xff] %vm1371, %v1367
      %1373 = vst.msk [vmem:[%s723 + $0x8] sm:$0xff] %vm1371, %v1370
      %1376 = vrot.lane.b32.xlu0 %v1299, 64
      %v1377 = vpop.permute.xlu0 %1376
      %1378 = vrot.lane.b32.xlu0 %v1300, 64
      %v1379 = vpop.permute.xlu0 %1378
      %v1382 = vmul.f32 %v1239, %v1377
      %v1383 = vmul.f32 %v1240, %v1379
      %1386 = vrot.lane.b32.xlu0 %v1307, 64
      %v1387 = vpop.permute.xlu0 %1386
      %1388 = vrot.lane.b32.xlu0 %v1308, 64
      %v1389 = vpop.permute.xlu0 %1388
      %v1392 = vmul.f32 %v1239, %v1387
      %v1393 = vmul.f32 %v1240, %v1389
      %v1394 = vadd.f32 %v1303, %v1311
      %v1395 = vadd.f32 %v1304, %v1312
      %1398 = vrot.lane.b32.xlu0 %v1394, 64
      %v1399 = vpop.permute.xlu0 %1398
      %1400 = vrot.lane.b32.xlu0 %v1395, 64
      %v1401 = vpop.permute.xlu0 %1400
      %v1404 = vmul.f32 %v1263, %v1399
      %v1405 = vmul.f32 %v1264, %v1401
      %v1406 = vadd.f32 %v1392, %v1404
      %v1407 = vadd.f32 %v1393, %v1405
      %v1408 = vsel %vm735, %v1382, 0.0
      %1409 = vadd.xlane.f32.xlu0 %v1408
      %v1410 = vpop.xlane.xlu0 %1409
      %v1411 = vsel %vm735, %v1383, 0.0
      %1412 = vadd.xlane.f32.xlu0 %v1411
      %v1413 = vpop.xlane.xlu0 %1412
      %1414 = vst.msk [vmem:[%s711] sm:$0xff] %vm1371, %v1410
      %1415 = vst.msk [vmem:[%s711 + $0x8] sm:$0xff] %vm1371, %v1413
      %v1416 = vsel %vm735, %v1406, 0.0
      %1417 = vadd.xlane.f32.xlu0 %v1416
      %v1418 = vpop.xlane.xlu0 %1417
      %v1419 = vsel %vm735, %v1407, 0.0
      %1420 = vadd.xlane.f32.xlu0 %v1419
      %v1421 = vpop.xlane.xlu0 %1420
      %1422 = vst.msk [vmem:[%s717] sm:$0xff] %vm1371, %v1418
      %1423 = vst.msk [vmem:[%s717 + $0x8] sm:$0xff] %vm1371, %v1421
      %v1424 = vld [vmem:[%s681] sm:$0xf]
      %v1425 = vld [vmem:[%s681 + $0x4] sm:$0xf]
      %v1426 = vunpack.c.l.bf16 %v1424
      %v1427 = vunpack.c.l.bf16 %v1425
      %v1428 = vld [vmem:[%s687] sm:$0xf]
      %v1429 = vld [vmem:[%s687 + $0x4] sm:$0xf]
      %v1430 = vunpack.c.l.bf16 %v1428
      %v1431 = vunpack.c.l.bf16 %v1429
      %v1432 = vld [vmem:[%s669] sm:$0xf]
      %v1433 = vld [vmem:[%s669 + $0x4] sm:$0xf]
      %v1434 = vunpack.c.l.bf16 %v1432
      %v1435 = vunpack.c.l.bf16 %v1433
      %v1436 = vld [vmem:[%s675] sm:$0xf]
      %v1437 = vld [vmem:[%s675 + $0x4] sm:$0xf]
      %v1438 = vunpack.c.l.bf16 %v1436
      %v1439 = vunpack.c.l.bf16 %v1437
      %v1440 = vld [vmem:[%s645] sm:$0xf]
      %v1441 = vld [vmem:[%s645 + $0x4] sm:$0xf]
      %v1442 = vunpack.c.l.bf16 %v1440
      %v1443 = vunpack.c.l.bf16 %v1441
      %v1444 = vld [vmem:[%s651] sm:$0xf]
      %v1445 = vld [vmem:[%s651 + $0x4] sm:$0xf]
      %v1446 = vunpack.c.l.bf16 %v1444
      %v1447 = vunpack.c.l.bf16 %v1445
      %v1448 = vld [vmem:[%s657] sm:$0xf]
      %v1449 = vld [vmem:[%s657 + $0x4] sm:$0xf]
      %v1450 = vunpack.c.l.bf16 %v1448
      %v1451 = vunpack.c.l.bf16 %v1449
      %v1452 = vld [vmem:[%s663] sm:$0xf]
      %v1453 = vld [vmem:[%s663 + $0x4] sm:$0xf]
      %v1454 = vunpack.c.l.bf16 %v1452
      %v1455 = vunpack.c.l.bf16 %v1453
      %1458 = vrot.lane.b32.xlu0 %v1426, 48
      %v1459 = vpop.permute.xlu0 %1458
      %1460 = vrot.lane.b32.xlu0 %v1427, 48
      %v1461 = vpop.permute.xlu0 %1460
      %v1464 = vmul.f32 %v1382, %v1459
      %v1465 = vmul.f32 %v1383, %v1461
      %1468 = vrot.lane.b32.xlu0 %v1430, 48
      %v1469 = vpop.permute.xlu0 %1468
      %1470 = vrot.lane.b32.xlu0 %v1431, 48
      %v1471 = vpop.permute.xlu0 %1470
      %v1474 = vmul.f32 %v1406, %v1469
      %v1475 = vmul.f32 %v1407, %v1471
      %v1476 = vadd.f32 %v1464, %v1474
      %v1477 = vadd.f32 %v1465, %v1475
      %v1478 = vsel %vm735, %v1476, 0.0
      %1479 = vadd.xlane.f32.xlu0 %v1478
      %v1480 = vpop.xlane.xlu0 %1479
      %v1481 = vsel %vm735, %v1477, 0.0
      %1482 = vadd.xlane.f32.xlu0 %v1481
      %v1483 = vpop.xlane.xlu0 %1482
      %1484 = vst.msk [vmem:[%s729] sm:$0xff] %vm1371, %v1480
      %1485 = vst.msk [vmem:[%s729 + $0x8] sm:$0xff] %vm1371, %v1483
      %1488 = vrot.lane.b32.xlu0 %v1434, 48
      %v1489 = vpop.permute.xlu0 %1488
      %1490 = vrot.lane.b32.xlu0 %v1435, 48
      %v1491 = vpop.permute.xlu0 %1490
      %v1494 = vmul.f32 %v1382, %v1489
      %v1495 = vmul.f32 %v1383, %v1491
      %1498 = vrot.lane.b32.xlu0 %v1438, 48
      %v1499 = vpop.permute.xlu0 %1498
      %1500 = vrot.lane.b32.xlu0 %v1439, 48
      %v1501 = vpop.permute.xlu0 %1500
      %v1504 = vmul.f32 %v1406, %v1499
      %v1505 = vmul.f32 %v1407, %v1501
      %v1506 = vadd.f32 %v1494, %v1504
      %v1507 = vadd.f32 %v1495, %v1505
      %v1508 = vsel %vm735, %v1506, 0.0
      %1509 = vadd.xlane.f32.xlu0 %v1508
      %v1510 = vpop.xlane.xlu0 %1509
      %v1511 = vsel %vm735, %v1507, 0.0
      %1512 = vadd.xlane.f32.xlu0 %v1511
      %v1513 = vpop.xlane.xlu0 %1512
      %vm1514 = vcmask 56368
      %1515 = vst.msk [vmem:[%s723] sm:$0xff] %vm1514, %v1510
      %1516 = vst.msk [vmem:[%s723 + $0x8] sm:$0xff] %vm1514, %v1513
      %1519 = vrot.lane.b32.xlu0 %v1442, 48
      %v1520 = vpop.permute.xlu0 %1519
      %1521 = vrot.lane.b32.xlu0 %v1443, 48
      %v1522 = vpop.permute.xlu0 %1521
      %v1525 = vmul.f32 %v1382, %v1520
      %v1526 = vmul.f32 %v1383, %v1522
      %1529 = vrot.lane.b32.xlu0 %v1450, 48
      %v1530 = vpop.permute.xlu0 %1529
      %1531 = vrot.lane.b32.xlu0 %v1451, 48
      %v1532 = vpop.permute.xlu0 %1531
      %v1535 = vmul.f32 %v1382, %v1530
      %v1536 = vmul.f32 %v1383, %v1532
      %v1537 = vadd.f32 %v1446, %v1454
      %v1538 = vadd.f32 %v1447, %v1455
      %1541 = vrot.lane.b32.xlu0 %v1537, 48
      %v1542 = vpop.permute.xlu0 %1541
      %1543 = vrot.lane.b32.xlu0 %v1538, 48
      %v1544 = vpop.permute.xlu0 %1543
      %v1547 = vmul.f32 %v1406, %v1542
      %v1548 = vmul.f32 %v1407, %v1544
      %v1549 = vadd.f32 %v1535, %v1547
      %v1550 = vadd.f32 %v1536, %v1548
      %v1551 = vsel %vm735, %v1525, 0.0
      %1552 = vadd.xlane.f32.xlu0 %v1551
      %v1553 = vpop.xlane.xlu0 %1552
      %v1554 = vsel %vm735, %v1526, 0.0
      %1555 = vadd.xlane.f32.xlu0 %v1554
      %v1556 = vpop.xlane.xlu0 %1555
      %1557 = vst.msk [vmem:[%s711] sm:$0xff] %vm1514, %v1553
      %1558 = vst.msk [vmem:[%s711 + $0x8] sm:$0xff] %vm1514, %v1556
      %v1559 = vsel %vm735, %v1549, 0.0
      %1560 = vadd.xlane.f32.xlu0 %v1559
      %v1561 = vpop.xlane.xlu0 %1560
      %v1562 = vsel %vm735, %v1550, 0.0
      %1563 = vadd.xlane.f32.xlu0 %v1562
      %v1564 = vpop.xlane.xlu0 %1563
      %1565 = vst.msk [vmem:[%s717] sm:$0xff] %vm1514, %v1561
      %1566 = vst.msk [vmem:[%s717 + $0x8] sm:$0xff] %vm1514, %v1564
      %v1567 = vld [vmem:[%s681] sm:$0xf]
      %v1568 = vld [vmem:[%s681 + $0x4] sm:$0xf]
      %v1569 = vunpack.c.l.bf16 %v1567
      %v1570 = vunpack.c.l.bf16 %v1568
      %v1571 = vld [vmem:[%s687] sm:$0xf]
      %v1572 = vld [vmem:[%s687 + $0x4] sm:$0xf]
      %v1573 = vunpack.c.l.bf16 %v1571
      %v1574 = vunpack.c.l.bf16 %v1572
      %v1575 = vld [vmem:[%s669] sm:$0xf]
      %v1576 = vld [vmem:[%s669 + $0x4] sm:$0xf]
      %v1577 = vunpack.c.l.bf16 %v1575
      %v1578 = vunpack.c.l.bf16 %v1576
      %v1579 = vld [vmem:[%s675] sm:$0xf]
      %v1580 = vld [vmem:[%s675 + $0x4] sm:$0xf]
      %v1581 = vunpack.c.l.bf16 %v1579
      %v1582 = vunpack.c.l.bf16 %v1580
      %v1583 = vld [vmem:[%s645] sm:$0xf]
      %v1584 = vld [vmem:[%s645 + $0x4] sm:$0xf]
      %v1585 = vunpack.c.l.bf16 %v1583
      %v1586 = vunpack.c.l.bf16 %v1584
      %v1587 = vld [vmem:[%s651] sm:$0xf]
      %v1588 = vld [vmem:[%s651 + $0x4] sm:$0xf]
      %v1589 = vunpack.c.l.bf16 %v1587
      %v1590 = vunpack.c.l.bf16 %v1588
      %v1591 = vld [vmem:[%s657] sm:$0xf]
      %v1592 = vld [vmem:[%s657 + $0x4] sm:$0xf]
      %v1593 = vunpack.c.l.bf16 %v1591
      %v1594 = vunpack.c.l.bf16 %v1592
      %v1595 = vld [vmem:[%s663] sm:$0xf]
      %v1596 = vld [vmem:[%s663 + $0x4] sm:$0xf]
      %v1597 = vunpack.c.l.bf16 %v1595
      %v1598 = vunpack.c.l.bf16 %v1596
      %1601 = vrot.lane.b32.xlu0 %v1569, 32
      %v1602 = vpop.permute.xlu0 %1601
      %1603 = vrot.lane.b32.xlu0 %v1570, 32
      %v1604 = vpop.permute.xlu0 %1603
      %v1607 = vmul.f32 %v1525, %v1602
      %v1608 = vmul.f32 %v1526, %v1604
      %1611 = vrot.lane.b32.xlu0 %v1573, 32
      %v1612 = vpop.permute.xlu0 %1611
      %1613 = vrot.lane.b32.xlu0 %v1574, 32
      %v1614 = vpop.permute.xlu0 %1613
      %v1617 = vmul.f32 %v1549, %v1612
      %v1618 = vmul.f32 %v1550, %v1614
      %v1619 = vadd.f32 %v1607, %v1617
      %v1620 = vadd.f32 %v1608, %v1618
      %v1621 = vsel %vm735, %v1619, 0.0
      %1622 = vadd.xlane.f32.xlu0 %v1621
      %v1623 = vpop.xlane.xlu0 %1622
      %v1624 = vsel %vm735, %v1620, 0.0
      %1625 = vadd.xlane.f32.xlu0 %v1624
      %v1626 = vpop.xlane.xlu0 %1625
      %1627 = vst.msk [vmem:[%s729] sm:$0xff] %vm1514, %v1623
      %1628 = vst.msk [vmem:[%s729 + $0x8] sm:$0xff] %vm1514, %v1626
      %1631 = vrot.lane.b32.xlu0 %v1577, 32
      %v1632 = vpop.permute.xlu0 %1631
      %1633 = vrot.lane.b32.xlu0 %v1578, 32
      %v1634 = vpop.permute.xlu0 %1633
      %v1637 = vmul.f32 %v1525, %v1632
      %v1638 = vmul.f32 %v1526, %v1634
      %1641 = vrot.lane.b32.xlu0 %v1581, 32
      %v1642 = vpop.permute.xlu0 %1641
      %1643 = vrot.lane.b32.xlu0 %v1582, 32
      %v1644 = vpop.permute.xlu0 %1643
      %v1647 = vmul.f32 %v1549, %v1642
      %v1648 = vmul.f32 %v1550, %v1644
      %v1649 = vadd.f32 %v1637, %v1647
      %v1650 = vadd.f32 %v1638, %v1648
      %v1651 = vsel %vm735, %v1649, 0.0
      %1652 = vadd.xlane.f32.xlu0 %v1651
      %v1653 = vpop.xlane.xlu0 %1652
      %v1654 = vsel %vm735, %v1650, 0.0
      %1655 = vadd.xlane.f32.xlu0 %v1654
      %v1656 = vpop.xlane.xlu0 %1655
      %vm1657 = vcmask 64568
      %1658 = vst.msk [vmem:[%s723] sm:$0xff] %vm1657, %v1653
      %1659 = vst.msk [vmem:[%s723 + $0x8] sm:$0xff] %vm1657, %v1656
      %1662 = vrot.lane.b32.xlu0 %v1585, 32
      %v1663 = vpop.permute.xlu0 %1662
      %1664 = vrot.lane.b32.xlu0 %v1586, 32
      %v1665 = vpop.permute.xlu0 %1664
      %v1668 = vmul.f32 %v1525, %v1663
      %v1669 = vmul.f32 %v1526, %v1665
      %1672 = vrot.lane.b32.xlu0 %v1593, 32
      %v1673 = vpop.permute.xlu0 %1672
      %1674 = vrot.lane.b32.xlu0 %v1594, 32
      %v1675 = vpop.permute.xlu0 %1674
      %v1678 = vmul.f32 %v1525, %v1673
      %v1679 = vmul.f32 %v1526, %v1675
      %v1680 = vadd.f32 %v1589, %v1597
      %v1681 = vadd.f32 %v1590, %v1598
      %1684 = vrot.lane.b32.xlu0 %v1680, 32
      %v1685 = vpop.permute.xlu0 %1684
      %1686 = vrot.lane.b32.xlu0 %v1681, 32
      %v1687 = vpop.permute.xlu0 %1686
      %v1690 = vmul.f32 %v1549, %v1685
      %v1691 = vmul.f32 %v1550, %v1687
      %v1692 = vadd.f32 %v1678, %v1690
      %v1693 = vadd.f32 %v1679, %v1691
      %v1694 = vsel %vm735, %v1668, 0.0
      %1695 = vadd.xlane.f32.xlu0 %v1694
      %v1696 = vpop.xlane.xlu0 %1695
      %v1697 = vsel %vm735, %v1669, 0.0
      %1698 = vadd.xlane.f32.xlu0 %v1697
      %v1699 = vpop.xlane.xlu0 %1698
      %1700 = vst.msk [vmem:[%s711] sm:$0xff] %vm1657, %v1696
      %1701 = vst.msk [vmem:[%s711 + $0x8] sm:$0xff] %vm1657, %v1699
      %v1702 = vsel %vm735, %v1692, 0.0
      %1703 = vadd.xlane.f32.xlu0 %v1702
      %v1704 = vpop.xlane.xlu0 %1703
      %v1705 = vsel %vm735, %v1693, 0.0
      %1706 = vadd.xlane.f32.xlu0 %v1705
      %v1707 = vpop.xlane.xlu0 %1706
      %1708 = vst.msk [vmem:[%s717] sm:$0xff] %vm1657, %v1704
      %1709 = vst.msk [vmem:[%s717 + $0x8] sm:$0xff] %vm1657, %v1707
      %v1710 = vld [vmem:[%s681] sm:$0xf]
      %v1711 = vld [vmem:[%s681 + $0x4] sm:$0xf]
      %v1712 = vunpack.c.l.bf16 %v1710
      %v1713 = vunpack.c.l.bf16 %v1711
      %v1714 = vld [vmem:[%s687] sm:$0xf]
      %v1715 = vld [vmem:[%s687 + $0x4] sm:$0xf]
      %v1716 = vunpack.c.l.bf16 %v1714
      %v1717 = vunpack.c.l.bf16 %v1715
      %v1718 = vld [vmem:[%s669] sm:$0xf]
      %v1719 = vld [vmem:[%s669 + $0x4] sm:$0xf]
      %v1720 = vunpack.c.l.bf16 %v1718
      %v1721 = vunpack.c.l.bf16 %v1719
      %v1722 = vld [vmem:[%s675] sm:$0xf]
      %v1723 = vld [vmem:[%s675 + $0x4] sm:$0xf]
      %v1724 = vunpack.c.l.bf16 %v1722
      %v1725 = vunpack.c.l.bf16 %v1723
      %v1726 = vld [vmem:[%s645] sm:$0xf]
      %v1727 = vld [vmem:[%s645 + $0x4] sm:$0xf]
      %v1728 = vunpack.c.l.bf16 %v1726
      %v1729 = vunpack.c.l.bf16 %v1727
      %v1730 = vld [vmem:[%s651] sm:$0xf]
      %v1731 = vld [vmem:[%s651 + $0x4] sm:$0xf]
      %v1732 = vunpack.c.l.bf16 %v1730
      %v1733 = vunpack.c.l.bf16 %v1731
      %v1734 = vld [vmem:[%s657] sm:$0xf]
      %v1735 = vld [vmem:[%s657 + $0x4] sm:$0xf]
      %v1736 = vunpack.c.l.bf16 %v1734
      %v1737 = vunpack.c.l.bf16 %v1735
      %v1738 = vld [vmem:[%s663] sm:$0xf]
      %v1739 = vld [vmem:[%s663 + $0x4] sm:$0xf]
      %v1740 = vunpack.c.l.bf16 %v1738
      %v1741 = vunpack.c.l.bf16 %v1739
      %1744 = vrot.lane.b32.xlu0 %v1712, 16
      %v1745 = vpop.permute.xlu0 %1744
      %1746 = vrot.lane.b32.xlu0 %v1713, 16
      %v1747 = vpop.permute.xlu0 %1746
      %v1750 = vmul.f32 %v1668, %v1745
      %v1751 = vmul.f32 %v1669, %v1747
      %1754 = vrot.lane.b32.xlu0 %v1716, 16
      %v1755 = vpop.permute.xlu0 %1754
      %1756 = vrot.lane.b32.xlu0 %v1717, 16
      %v1757 = vpop.permute.xlu0 %1756
      %v1760 = vmul.f32 %v1692, %v1755
      %v1761 = vmul.f32 %v1693, %v1757
      %v1762 = vadd.f32 %v1750, %v1760
      %v1763 = vadd.f32 %v1751, %v1761
      %v1764 = vsel %vm735, %v1762, 0.0
      %1765 = vadd.xlane.f32.xlu0 %v1764
      %v1766 = vpop.xlane.xlu0 %1765
      %v1767 = vsel %vm735, %v1763, 0.0
      %1768 = vadd.xlane.f32.xlu0 %v1767
      %v1769 = vpop.xlane.xlu0 %1768
      %1770 = vst.msk [vmem:[%s729] sm:$0xff] %vm1657, %v1766
      %1771 = vst.msk [vmem:[%s729 + $0x8] sm:$0xff] %vm1657, %v1769
      %1774 = vrot.lane.b32.xlu0 %v1720, 16
      %v1775 = vpop.permute.xlu0 %1774
      %1776 = vrot.lane.b32.xlu0 %v1721, 16
      %v1777 = vpop.permute.xlu0 %1776
      %v1780 = vmul.f32 %v1668, %v1775
      %v1781 = vmul.f32 %v1669, %v1777
      %1784 = vrot.lane.b32.xlu0 %v1724, 16
      %v1785 = vpop.permute.xlu0 %1784
      %1786 = vrot.lane.b32.xlu0 %v1725, 16
      %v1787 = vpop.permute.xlu0 %1786
      %v1790 = vmul.f32 %v1692, %v1785
      %v1791 = vmul.f32 %v1693, %v1787
      %v1792 = vadd.f32 %v1780, %v1790
      %v1793 = vadd.f32 %v1781, %v1791
      %v1794 = vsel %vm735, %v1792, 0.0
      %1795 = vadd.xlane.f32.xlu0 %v1794
      %v1796 = vpop.xlane.xlu0 %1795
      %v1797 = vsel %vm735, %v1793, 0.0
      %1798 = vadd.xlane.f32.xlu0 %v1797
      %v1799 = vpop.xlane.xlu0 %1798
      %vm1800 = vcmask 72768
      %1801 = vst.msk [vmem:[%s723] sm:$0xff] %vm1800, %v1796
      %1802 = vst.msk [vmem:[%s723 + $0x8] sm:$0xff] %vm1800, %v1799
      %1805 = vrot.lane.b32.xlu0 %v1728, 16
      %v1806 = vpop.permute.xlu0 %1805
      %1807 = vrot.lane.b32.xlu0 %v1729, 16
      %v1808 = vpop.permute.xlu0 %1807
      %v1811 = vmul.f32 %v1668, %v1806
      %v1812 = vmul.f32 %v1669, %v1808
      %1815 = vrot.lane.b32.xlu0 %v1736, 16
      %v1816 = vpop.permute.xlu0 %1815
      %1817 = vrot.lane.b32.xlu0 %v1737, 16
      %v1818 = vpop.permute.xlu0 %1817
      %v1821 = vmul.f32 %v1668, %v1816
      %v1822 = vmul.f32 %v1669, %v1818
      %v1823 = vadd.f32 %v1732, %v1740
      %v1824 = vadd.f32 %v1733, %v1741
      %1827 = vrot.lane.b32.xlu0 %v1823, 16
      %v1828 = vpop.permute.xlu0 %1827
      %1829 = vrot.lane.b32.xlu0 %v1824, 16
      %v1830 = vpop.permute.xlu0 %1829
      %v1833 = vmul.f32 %v1692, %v1828
      %v1834 = vmul.f32 %v1693, %v1830
      %v1835 = vadd.f32 %v1821, %v1833
      %v1836 = vadd.f32 %v1822, %v1834
      %v1837 = vsel %vm735, %v1811, 0.0
      %1838 = vadd.xlane.f32.xlu0 %v1837
      %v1839 = vpop.xlane.xlu0 %1838
      %v1840 = vsel %vm735, %v1812, 0.0
      %1841 = vadd.xlane.f32.xlu0 %v1840
      %v1842 = vpop.xlane.xlu0 %1841
      %1843 = vst.msk [vmem:[%s711] sm:$0xff] %vm1800, %v1839
      %1844 = vst.msk [vmem:[%s711 + $0x8] sm:$0xff] %vm1800, %v1842
      %v1845 = vsel %vm735, %v1835, 0.0
      %1846 = vadd.xlane.f32.xlu0 %v1845
      %v1847 = vpop.xlane.xlu0 %1846
      %v1848 = vsel %vm735, %v1836, 0.0
      %1849 = vadd.xlane.f32.xlu0 %v1848
      %v1850 = vpop.xlane.xlu0 %1849
      %1851 = vst.msk [vmem:[%s717] sm:$0xff] %vm1800, %v1847
      %1852 = vst.msk [vmem:[%s717 + $0x8] sm:$0xff] %vm1800, %v1850
      %s1853 = smul.u32 2, %s26
      %p1854 = scmp.lt.s32.totalorder %s1853, 3
      %s1855 = scalar_select %p1854, %s1853, 3
      %s1856 = smul.addr %s1855, 8
      %s1857 = scalar_lea.vmem %s11, %s1856
      %s1858 = smul.u32 2, %s26
      %p1859 = scmp.lt.s32.totalorder %s1858, 3
      %s1860 = scalar_select %p1859, %s1858, 3
      %s1861 = smul.addr %s1860, 8
      %s1862 = scalar_lea.vmem %s12, %s1861
      %s1863 = smul.u32 2, %s26
      %p1864 = scmp.lt.s32.totalorder %s1863, 3
      %s1865 = scalar_select %p1864, %s1863, 3
      %s1866 = smul.addr %s1865, 8
      %s1867 = scalar_lea.vmem %s13, %s1866
      %s1868 = smul.u32 2, %s26
      %p1869 = scmp.lt.s32.totalorder %s1868, 3
      %s1870 = scalar_select %p1869, %s1868, 3
      %s1871 = smul.addr %s1870, 8
      %s1872 = scalar_lea.vmem %s14, %s1871
      // Predicated region
      $region65: #{tpu_custom_call.1} parent=63 // pred_check
        %p1873 = pneg %p330
      $region66: #{tpu_custom_call.1} parent=63 // pred_check_branch
        %1875 = sbr.rel (%p1873) target = $region68
      $region67: #{tpu_custom_call.1} parent=63 // pred_region
        %s1876 = smul.u32 2, %s26
      $region68: #{tpu_custom_call.1} parent=63 // pred_fallthru
        _
      // Predicated region
      $region69: #{tpu_custom_call.1} parent=63 // pred_check
        %p1877 = pneg %p356
      $region70: #{tpu_custom_call.1} parent=63 // pred_check_branch
        %1879 = sbr.rel (%p1877) target = $region72
      $region71: #{tpu_custom_call.1} parent=63 // pred_region
        %s1880 = smul.u32 2, %s26
      $region72: #{tpu_custom_call.1} parent=63 // pred_fallthru
        _
      // Predicated region
      $region73: #{tpu_custom_call.1} parent=63 // pred_check
        %p1881 = pneg %p382
      $region74: #{tpu_custom_call.1} parent=63 // pred_check_branch
        %1883 = sbr.rel (%p1881) target = $region76
      $region75: #{tpu_custom_call.1} parent=63 // pred_region
        %s1884 = smul.u32 2, %s26
      $region76: #{tpu_custom_call.1} parent=63 // pred_fallthru
        _
      // Predicated region
      $region77: #{tpu_custom_call.1} parent=63 // pred_check
        %p1885 = pneg %p408
      $region78: #{tpu_custom_call.1} parent=63 // pred_check_branch
        %1887 = sbr.rel (%p1885) target = $region80
      $region79: #{tpu_custom_call.1} parent=63 // pred_region
        %s1888 = smul.u32 2, %s26
      $region80: #{tpu_custom_call.1} parent=63 // pred_fallthru
        _
    $region64: #{tpu_custom_call.1} parent=5 // pred_fallthru
      _
    %p1889 = scmp.le.s32.totalorder 2, %s21
    // Predicated region
    $region81: #{tpu_custom_call.1} parent=5 // pred_check
      %p1890 = pneg %p1889
    $region82: #{tpu_custom_call.1} parent=5 // pred_check_branch
      %1892 = sbr.rel (%p1890) target = $region84
    $region83: #{tpu_custom_call.1} parent=5 // pred_region
      %s1893 = ssub.s32 %s21, 2
      // Predicated region
      $region85: #{tpu_custom_call.1} parent=83 // pred_check
        %p1894 = pneg %p336
      $region86: #{tpu_custom_call.1} parent=83 // pred_check_branch
        %1896 = sbr.rel (%p1894) target = $region88
      $region87: #{tpu_custom_call.1} parent=83 // pred_region
        %s1897 = smul.u32 2, %s27
        %p1898 = scmp.lt.s32.totalorder %s1897, 3
        %s1899 = scalar_select %p1898, %s1897, 3
        %s1900 = smul.addr %s1899, 8
        %s1901 = scalar_lea.vmem %s11, %s1900
      $region88: #{tpu_custom_call.1} parent=83 // pred_fallthru
        _
      // Predicated region
      $region89: #{tpu_custom_call.1} parent=83 // pred_check
        %p1902 = pneg %p362
      $region90: #{tpu_custom_call.1} parent=83 // pred_check_branch
        %1904 = sbr.rel (%p1902) target = $region92
      $region91: #{tpu_custom_call.1} parent=83 // pred_region
        %s1905 = smul.u32 2, %s27
        %p1906 = scmp.lt.s32.totalorder %s1905, 3
        %s1907 = scalar_select %p1906, %s1905, 3
        %s1908 = smul.addr %s1907, 8
        %s1909 = scalar_lea.vmem %s12, %s1908
      $region92: #{tpu_custom_call.1} parent=83 // pred_fallthru
        _
      // Predicated region
      $region93: #{tpu_custom_call.1} parent=83 // pred_check
        %p1910 = pneg %p388
      $region94: #{tpu_custom_call.1} parent=83 // pred_check_branch
        %1912 = sbr.rel (%p1910) target = $region96
      $region95: #{tpu_custom_call.1} parent=83 // pred_region
        %s1913 = smul.u32 2, %s27
        %p1914 = scmp.lt.s32.totalorder %s1913, 3
        %s1915 = scalar_select %p1914, %s1913, 3
        %s1916 = smul.addr %s1915, 8
        %s1917 = scalar_lea.vmem %s13, %s1916
      $region96: #{tpu_custom_call.1} parent=83 // pred_fallthru
        _
      // Predicated region
      $region97: #{tpu_custom_call.1} parent=83 // pred_check
        %p1918 = pneg %p414
      $region98: #{tpu_custom_call.1} parent=83 // pred_check_branch
        %1920 = sbr.rel (%p1918) target = $region100
      $region99: #{tpu_custom_call.1} parent=83 // pred_region
        %s1921 = smul.u32 2, %s27
        %p1922 = scmp.lt.s32.totalorder %s1921, 3
        %s1923 = scalar_select %p1922, %s1921, 3
        %s1924 = smul.addr %s1923, 8
        %s1925 = scalar_lea.vmem %s14, %s1924
      $region100: #{tpu_custom_call.1} parent=83 // pred_fallthru
        _
    $region84: #{tpu_custom_call.1} parent=5 // pred_fallthru
      _
  $region6: #{tpu_custom_call.1} parent=0 // loop_footer
    %s25 = sadd.s32 1, %s21
  $region7: #{tpu_custom_call.1} parent=0 // loop_footer_branch
    %20 = sbr.rel target = $region3
  $region8: #{tpu_custom_call.1} parent=0 // loop_exit
    _

</llo_original>
